<compile_context>
chip_gen: v7x
topology: tpu7x:2x2x1
jax: 0.10.0
libtpu: 0.0.40
codegen_flags: <defaults>
</compile_context>

<pallas_src>
import functools

import jax
import jax.numpy as jnp
from jax import lax
from jax.experimental import pallas as pl
from jax.experimental.pallas import tpu as pltpu


# ----------------------------------------------------------------------------------
# Kernel A: 3x3 conv (pad=1) + per-image centered BN partial statistics.
# Layout: planar NCHW, spatial flattened into the lane dim (HW lanes -> lane-dense).
# ----------------------------------------------------------------------------------
def conv_stats_kernel(x_ref, w_ref, m_ref, y_ref, psum_ref, psq_ref, *, width):
    # x_ref:    (1, Cin, HW)   f32  one image, spatial flattened into lanes
    # w_ref:    (9, Cout, Cin) bf16 taps, k = 3*(dy+1) + (dx+1)
    # m_ref:    (9, 1, HW)     bf16 validity mask of each tap's shifted neighbour
    # y_ref:    (1, Cout, HW)  bf16 raw conv output (bias dropped: it cancels in BN)
    # psum_ref: (1, Cout, 1)   f32  per-image channel sums
    # psq_ref:  (1, Cout, 1)   f32  per-image centered sums of squares
    _, cin, hw = x_ref.shape

    x = x_ref[0].astype(jnp.bfloat16)            # cast in-kernel: no extra HBM pass for x

    # One zero-padded flat row; every tap's spatial shift is then a *static lane slice*.
    pad = width + 1
    zeros = jnp.zeros((cin, pad), jnp.bfloat16)
    xp = jnp.concatenate([zeros, x, zeros], axis=-1)         # (Cin, HW + 2W + 2)

    acc = None
    for k in range(9):
        dy = k // 3 - 1
        dx = k % 3 - 1
        if dy == 0 and dx == 0:
            xs = x                                           # centre tap: no shift, no mask
        else:
            start = pad + dy * width + dx
            xs = xp[:, start:start + hw] * m_ref[k]          # shifted neighbour, boundary-masked
        # (Cout, Cin) @ (Cin, HW): MXU N dim = HW lanes (full width), f32 accumulation.
        contrib = jnp.dot(w_ref[k], xs, preferred_element_type=jnp.float32)
        acc = contrib if acc is None else acc + contrib      # (Cout, HW) f32

    y_ref[0] = acc.astype(y_ref.dtype)

    # Per-image *centered* partials: better conditioned than E[y^2] - E[y]^2.
    s = jnp.sum(acc, axis=-1, keepdims=True)                 # (Cout, 1)
    mu = s * (1.0 / hw)
    d = acc - mu
    psum_ref[0] = s
    psq_ref[0] = jnp.sum(d * d, axis=-1, keepdims=True)


# ----------------------------------------------------------------------------------
# Kernel B: per-channel affine (BN) + ReLU.  Rows = (image, channel) pairs, lanes = HW.
# Output is written lane-dense, directly in NCHW order, as f32.
# ----------------------------------------------------------------------------------
def bn_relu_kernel(y_ref, scale_ref, shift_ref, o_ref):
    y = y_ref[...].astype(jnp.float32)                       # (TR, HW)
    o_ref[...] = jnp.maximum(y * scale_ref[...] + shift_ref[...], 0.0)


def _pick_row_tile(rows, bytes_per_row, target_bytes=4 * 1024 * 1024):
    """Largest row tile that divides `rows`, is a multiple of 8 (sublane tile), and keeps
    the per-step block pair near `target_bytes` (tiles sized by bytes, not row count)."""
    if rows * bytes_per_row <= target_bytes or rows % 8 != 0:
        return rows
    best = 8
    t = 8
    while t <= rows:
        if rows % t == 0 and t * bytes_per_row <= target_bytes:
            best = t
        t += 8
    return best


def _vmem_limit_bytes():
    """Scoped-VMEM limit derived from hardware (v5e/v6e: 128 MiB, v7x: 64 MiB physical)."""
    try:
        cap = int(pltpu.get_tpu_info().vmem_capacity_bytes)
        return min(cap // 2, 64 * 1024 * 1024)
    except Exception:
        return 32 * 1024 * 1024


# ----------------------------------------------------------------------------------
# Wrapper
# ----------------------------------------------------------------------------------
@functools.partial(jax.jit, static_argnames=("eps",))
def conv_batchnorm_b(x_nchw, w_hwio, bias, gamma, beta, eps=1e-5):
    """Forward of ConvBatchNorm_b. x_nchw: (N, Cin, H, W) f32 -> (N, Cout, H, W) f32.

    `bias` is accepted for API parity with nn.Conv2d but is mathematically irrelevant:
    training-mode BatchNorm subtracts the batch mean, so a per-channel constant cancels
    exactly in (y - mean) and leaves the variance unchanged.
    """
    del bias
    N, Cin, H, W = x_nchw.shape
    Cout = w_hwio.shape[-1]
    HW = H * W
    vmem_limit = _vmem_limit_bytes()

    # ---- layout prep (free or tiny) ----
    x_flat = x_nchw.reshape(N, Cin, HW)                                   # free dim-merge
    w9 = jnp.transpose(w_hwio.reshape(9, Cin, Cout), (0, 2, 1)).astype(jnp.bfloat16)

    # Boundary-validity masks for each tap's shift: tiny constants, fetched once
    # (constant index_map keeps them resident in VMEM for the whole grid).
    hh = jnp.arange(H).reshape(H, 1)
    ww = jnp.arange(W).reshape(1, W)
    masks = []
    for k in range(9):
        dy = k // 3 - 1
        dx = k % 3 - 1
        valid = ((hh + dy >= 0) & (hh + dy < H) & (ww + dx >= 0) & (ww + dx < W))
        masks.append(valid.reshape(1, HW))
    mask9 = jnp.stack(masks, axis=0).astype(jnp.bfloat16)                 # (9, 1, HW)

    # ---- Kernel A: conv + per-image partial stats (batch axis fully parallel) ----
    y, psum, psq = pl.pallas_call(
        functools.partial(conv_stats_kernel, width=W),
        out_shape=(
            jax.ShapeDtypeStruct((N, Cout, HW), jnp.bfloat16),
            jax.ShapeDtypeStruct((N, Cout, 1), jnp.float32),
            jax.ShapeDtypeStruct((N, Cout, 1), jnp.float32),
        ),
        grid_spec=pltpu.PrefetchScalarGridSpec(
            num_scalar_prefetch=0,
            grid=(N,),
            in_specs=[
                pl.BlockSpec((1, Cin, HW), lambda n: (n, 0, 0)),
                pl.BlockSpec((9, Cout, Cin), lambda n: (0, 0, 0)),
                pl.BlockSpec((9, 1, HW), lambda n: (0, 0, 0)),
            ],
            out_specs=[
                pl.BlockSpec((1, Cout, HW), lambda n: (n, 0, 0)),
                pl.BlockSpec((1, Cout, 1), lambda n: (n, 0, 0)),
                pl.BlockSpec((1, Cout, 1), lambda n: (n, 0, 0)),
            ],
        ),
        compiler_params=pltpu.CompilerParams(
            dimension_semantics=("parallel",),
            vmem_limit_bytes=vmem_limit),
    )(x_flat, w9, mask9)

    # ---- Glue: pooled training-mode BN statistics (numerically stable) ----
    # TODO(synk): BatchNorm2d running_mean/running_var buffer updates (training-time
    # side effect) are not emitted; they do not affect this forward output.
    cnt = jnp.float32(N * HW)
    psum2 = psum[:, :, 0]                                     # (N, Cout)
    psq2 = psq[:, :, 0]
    mean = jnp.sum(psum2, axis=0) / cnt                       # (Cout,)
    mean_b = psum2 / jnp.float32(HW)                          # per-image means
    var = (jnp.sum(psq2, axis=0)
           + jnp.float32(HW) * jnp.sum((mean_b - mean) ** 2, axis=0)) / cnt
    var = jnp.maximum(var, 0.0)
    inv_std = lax.rsqrt(var + jnp.float32(eps))
    scale_c = gamma.astype(jnp.float32) * inv_std             # (Cout,)
    shift_c = beta.astype(jnp.float32) - mean * scale_c

    # ---- Kernel B: y*scale + shift, ReLU; writes NCHW f32 directly ----
    rows = N * Cout
    y2 = y.reshape(rows, HW)                                  # free dim-merge
    scale_rows = jnp.tile(scale_c, (N,)).reshape(rows, 1)     # row r -> channel r % Cout
    shift_rows = jnp.tile(shift_c, (N,)).reshape(rows, 1)

    bytes_per_row = HW * (2 + 4) + 8                          # bf16 in + f32 out + scale/shift
    tr = _pick_row_tile(rows, bytes_per_row)
    out2 = pl.pallas_call(
        bn_relu_kernel,
        out_shape=jax.ShapeDtypeStruct((rows, HW), jnp.float32),
        grid_spec=pltpu.PrefetchScalarGridSpec(
            num_scalar_prefetch=0,
            grid=(rows // tr,),
            in_specs=[
                pl.BlockSpec((tr, HW), lambda i: (i, 0)),
                pl.BlockSpec((tr, 1), lambda i: (i, 0)),
                pl.BlockSpec((tr, 1), lambda i: (i, 0)),
            ],
            out_specs=pl.BlockSpec((tr, HW), lambda i: (i, 0)),
        ),
        compiler_params=pltpu.CompilerParams(
            dimension_semantics=("parallel",),
            vmem_limit_bytes=vmem_limit),
    )(y2, scale_rows, shift_rows)

    return out2.reshape(N, Cout, H, W)                        # already NCHW, already f32


# ----------------------------------------------------------------------------------
# Pure-JAX reference
# ----------------------------------------------------------------------------------
def reference(x_nchw, w_hwio, bias, gamma, beta, eps=1e-5):
    w_oihw = jnp.transpose(w_hwio, (3, 2, 0, 1))  # HWIO -> OIHW
    y = lax.conv_general_dilated(
        x_nchw, w_oihw, window_strides=(1, 1), padding=((1, 1), (1, 1)),
        dimension_numbers=("NCHW", "OIHW", "NCHW"))
    y = y + bias.reshape(1, -1, 1, 1)
    mean = jnp.mean(y, axis=(0, 2, 3), keepdims=True)
    var = jnp.mean((y - mean) ** 2, axis=(0, 2, 3), keepdims=True)
    yhat = (y - mean) * lax.rsqrt(var + eps)
    out = gamma.reshape(1, -1, 1, 1) * yhat + beta.reshape(1, -1, 1, 1)
    return jnp.maximum(out, 0.0)


if __name__ == "__main__":
    key = jax.random.PRNGKey(0)
    N, Cin, Cout, H, W = 2, 4, 8, 16, 16

    k1, k2, k3, k4, k5 = jax.random.split(key, 5)
    x = jax.random.normal(k1, (N, Cin, H, W), dtype=jnp.float32)
    fan_in = Cin * 3 * 3
    bound = 1.0 / float(jnp.sqrt(jnp.float32(fan_in)))
    w = jax.random.uniform(k2, (3, 3, Cin, Cout), jnp.float32, -bound, bound)  # HWIO
    b = jax.random.uniform(k3, (Cout,), jnp.float32, -bound, bound)
    gamma = 1.0 + 0.1 * jax.random.normal(k4, (Cout,), jnp.float32)
    beta = 0.1 * jax.random.normal(k5, (Cout,), jnp.float32)

    out = conv_batchnorm_b(x, w, b, gamma, beta)
    out = jax.block_until_ready(out)

    ref = reference(x, w, b, gamma, beta)
    assert out.shape == (N, Cout, H, W)
    err = float(jnp.max(jnp.abs(out - ref)))
    # bf16 MXU operands + bf16 intermediate y -> looser tolerance than a pure-f32 path.
    assert jnp.allclose(out, ref, atol=5e-2, rtol=5e-2), f"max abs err {err}"

    print("KERNEL_OK")
</pallas_src>

<mosaic_0001>
module attributes {stable_mosaic.version = 11 : i64} {
  func.func @conv_stats_kernel(%arg0: i32, %arg1: memref<1x4x256xf32, #tpu.memory_space<vmem>>, %arg2: memref<9x8x4xbf16, #tpu.memory_space<vmem>>, %arg3: memref<9x1x256xbf16, #tpu.memory_space<vmem>>, %arg4: memref<1x8x256xbf16, #tpu.memory_space<vmem>>, %arg5: memref<1x8x1xf32, #tpu.memory_space<vmem>>, %arg6: memref<1x8x1xf32, #tpu.memory_space<vmem>>) attributes {dimension_semantics = [#tpu.dimension_semantics<parallel>], iteration_bounds = array<i64: 2>, scalar_prefetch = 0 : i64, scratch_operands = 0 : i64, tpu.core_type = #tpu.core_type<tc>, window_params = [{transform_indices = @transform_0, window_bounds = array<i64: 1, 4, 256>}, {pipeline_mode = #tpu.pipeline_mode<synchronous>, transform_indices = @transform_1, window_bounds = array<i64: 9, 8, 4>}, {pipeline_mode = #tpu.pipeline_mode<synchronous>, transform_indices = @transform_2, window_bounds = array<i64: 9, 1, 256>}, {transform_indices = @transform_3, window_bounds = array<i64: 1, 8, 256>}, {transform_indices = @transform_4, window_bounds = array<i64: 1, 8, 1>}, {transform_indices = @transform_5, window_bounds = array<i64: 1, 8, 1>}]} {
    %c0 = arith.constant 0 : index
    %c0_0 = arith.constant 0 : index
    %c0_1 = arith.constant 0 : index
    %0 = vector.load %arg1[%c0, %c0_0, %c0_1] : memref<1x4x256xf32, #tpu.memory_space<vmem>>, vector<1x4x256xf32>
    %1 = vector.shape_cast %0 : vector<1x4x256xf32> to vector<4x256xf32>
    %2 = arith.truncf %1 : vector<4x256xf32> to vector<4x256xbf16>
    %cst = arith.constant 0.000000e+00 : bf16
    %3 = vector.broadcast %cst : bf16 to vector<4x17xbf16>
    %4 = tpu.concatenate %3, %2, %3 in 1 : vector<4x17xbf16>, vector<4x256xbf16>, vector<4x17xbf16> -> vector<4x290xbf16>
    %5 = vector.extract_strided_slice %4 {offsets = [0, 0], sizes = [4, 256], strides = [1, 1]} : vector<4x290xbf16> to vector<4x256xbf16>
    %c0_2 = arith.constant 0 : index
    %c0_3 = arith.constant 0 : index
    %c0_4 = arith.constant 0 : index
    %6 = vector.load %arg3[%c0_2, %c0_3, %c0_4] : memref<9x1x256xbf16, #tpu.memory_space<vmem>>, vector<1x1x256xbf16>
    %7 = vector.shape_cast %6 : vector<1x1x256xbf16> to vector<1x256xbf16>
    %8 = vector.broadcast %7 : vector<1x256xbf16> to vector<4x256xbf16>
    %9 = arith.mulf %5, %8 : vector<4x256xbf16>
    %c0_5 = arith.constant 0 : index
    %c0_6 = arith.constant 0 : index
    %c0_7 = arith.constant 0 : index
    %10 = vector.load %arg2[%c0_5, %c0_6, %c0_7] : memref<9x8x4xbf16, #tpu.memory_space<vmem>>, vector<1x8x4xbf16>
    %11 = vector.shape_cast %10 : vector<1x8x4xbf16> to vector<8x4xbf16>
    %cst_8 = arith.constant dense<0.000000e+00> : vector<8x256xf32>
    %12 = tpu.matmul %11, %9, %cst_8 {dimension_numbers = #tpu.dot_dimension_numbers<[1], [0], [0], [1], [0, 0, 1, 1], [], []>} : vector<8x4xbf16>, vector<4x256xbf16>, vector<8x256xf32> -> vector<8x256xf32>
    %13 = vector.extract_strided_slice %4 {offsets = [0, 1], sizes = [4, 256], strides = [1, 1]} : vector<4x290xbf16> to vector<4x256xbf16>
    %c1 = arith.constant 1 : index
    %c0_9 = arith.constant 0 : index
    %c0_10 = arith.constant 0 : index
    %14 = vector.load %arg3[%c1, %c0_9, %c0_10] : memref<9x1x256xbf16, #tpu.memory_space<vmem>>, vector<1x1x256xbf16>
    %15 = vector.shape_cast %14 : vector<1x1x256xbf16> to vector<1x256xbf16>
    %16 = vector.broadcast %15 : vector<1x256xbf16> to vector<4x256xbf16>
    %17 = arith.mulf %13, %16 : vector<4x256xbf16>
    %c1_11 = arith.constant 1 : index
    %c0_12 = arith.constant 0 : index
    %c0_13 = arith.constant 0 : index
    %18 = vector.load %arg2[%c1_11, %c0_12, %c0_13] : memref<9x8x4xbf16, #tpu.memory_space<vmem>>, vector<1x8x4xbf16>
    %19 = vector.shape_cast %18 : vector<1x8x4xbf16> to vector<8x4xbf16>
    %cst_14 = arith.constant dense<0.000000e+00> : vector<8x256xf32>
    %20 = tpu.matmul %19, %17, %cst_14 {dimension_numbers = #tpu.dot_dimension_numbers<[1], [0], [0], [1], [0, 0, 1, 1], [], []>} : vector<8x4xbf16>, vector<4x256xbf16>, vector<8x256xf32> -> vector<8x256xf32>
    %21 = arith.addf %12, %20 : vector<8x256xf32>
    %22 = vector.extract_strided_slice %4 {offsets = [0, 2], sizes = [4, 256], strides = [1, 1]} : vector<4x290xbf16> to vector<4x256xbf16>
    %c2 = arith.constant 2 : index
    %c0_15 = arith.constant 0 : index
    %c0_16 = arith.constant 0 : index
    %23 = vector.load %arg3[%c2, %c0_15, %c0_16] : memref<9x1x256xbf16, #tpu.memory_space<vmem>>, vector<1x1x256xbf16>
    %24 = vector.shape_cast %23 : vector<1x1x256xbf16> to vector<1x256xbf16>
    %25 = vector.broadcast %24 : vector<1x256xbf16> to vector<4x256xbf16>
    %26 = arith.mulf %22, %25 : vector<4x256xbf16>
    %c2_17 = arith.constant 2 : index
    %c0_18 = arith.constant 0 : index
    %c0_19 = arith.constant 0 : index
    %27 = vector.load %arg2[%c2_17, %c0_18, %c0_19] : memref<9x8x4xbf16, #tpu.memory_space<vmem>>, vector<1x8x4xbf16>
    %28 = vector.shape_cast %27 : vector<1x8x4xbf16> to vector<8x4xbf16>
    %cst_20 = arith.constant dense<0.000000e+00> : vector<8x256xf32>
    %29 = tpu.matmul %28, %26, %cst_20 {dimension_numbers = #tpu.dot_dimension_numbers<[1], [0], [0], [1], [0, 0, 1, 1], [], []>} : vector<8x4xbf16>, vector<4x256xbf16>, vector<8x256xf32> -> vector<8x256xf32>
    %30 = arith.addf %21, %29 : vector<8x256xf32>
    %31 = vector.extract_strided_slice %4 {offsets = [0, 16], sizes = [4, 256], strides = [1, 1]} : vector<4x290xbf16> to vector<4x256xbf16>
    %c3 = arith.constant 3 : index
    %c0_21 = arith.constant 0 : index
    %c0_22 = arith.constant 0 : index
    %32 = vector.load %arg3[%c3, %c0_21, %c0_22] : memref<9x1x256xbf16, #tpu.memory_space<vmem>>, vector<1x1x256xbf16>
    %33 = vector.shape_cast %32 : vector<1x1x256xbf16> to vector<1x256xbf16>
    %34 = vector.broadcast %33 : vector<1x256xbf16> to vector<4x256xbf16>
    %35 = arith.mulf %31, %34 : vector<4x256xbf16>
    %c3_23 = arith.constant 3 : index
    %c0_24 = arith.constant 0 : index
    %c0_25 = arith.constant 0 : index
    %36 = vector.load %arg2[%c3_23, %c0_24, %c0_25] : memref<9x8x4xbf16, #tpu.memory_space<vmem>>, vector<1x8x4xbf16>
    %37 = vector.shape_cast %36 : vector<1x8x4xbf16> to vector<8x4xbf16>
    %cst_26 = arith.constant dense<0.000000e+00> : vector<8x256xf32>
    %38 = tpu.matmul %37, %35, %cst_26 {dimension_numbers = #tpu.dot_dimension_numbers<[1], [0], [0], [1], [0, 0, 1, 1], [], []>} : vector<8x4xbf16>, vector<4x256xbf16>, vector<8x256xf32> -> vector<8x256xf32>
    %39 = arith.addf %30, %38 : vector<8x256xf32>
    %c4 = arith.constant 4 : index
    %c0_27 = arith.constant 0 : index
    %c0_28 = arith.constant 0 : index
    %40 = vector.load %arg2[%c4, %c0_27, %c0_28] : memref<9x8x4xbf16, #tpu.memory_space<vmem>>, vector<1x8x4xbf16>
    %41 = vector.shape_cast %40 : vector<1x8x4xbf16> to vector<8x4xbf16>
    %cst_29 = arith.constant dense<0.000000e+00> : vector<8x256xf32>
    %42 = tpu.matmul %41, %2, %cst_29 {dimension_numbers = #tpu.dot_dimension_numbers<[1], [0], [0], [1], [0, 0, 1, 1], [], []>} : vector<8x4xbf16>, vector<4x256xbf16>, vector<8x256xf32> -> vector<8x256xf32>
    %43 = arith.addf %39, %42 : vector<8x256xf32>
    %44 = vector.extract_strided_slice %4 {offsets = [0, 18], sizes = [4, 256], strides = [1, 1]} : vector<4x290xbf16> to vector<4x256xbf16>
    %c5 = arith.constant 5 : index
    %c0_30 = arith.constant 0 : index
    %c0_31 = arith.constant 0 : index
    %45 = vector.load %arg3[%c5, %c0_30, %c0_31] : memref<9x1x256xbf16, #tpu.memory_space<vmem>>, vector<1x1x256xbf16>
    %46 = vector.shape_cast %45 : vector<1x1x256xbf16> to vector<1x256xbf16>
    %47 = vector.broadcast %46 : vector<1x256xbf16> to vector<4x256xbf16>
    %48 = arith.mulf %44, %47 : vector<4x256xbf16>
    %c5_32 = arith.constant 5 : index
    %c0_33 = arith.constant 0 : index
    %c0_34 = arith.constant 0 : index
    %49 = vector.load %arg2[%c5_32, %c0_33, %c0_34] : memref<9x8x4xbf16, #tpu.memory_space<vmem>>, vector<1x8x4xbf16>
    %50 = vector.shape_cast %49 : vector<1x8x4xbf16> to vector<8x4xbf16>
    %cst_35 = arith.constant dense<0.000000e+00> : vector<8x256xf32>
    %51 = tpu.matmul %50, %48, %cst_35 {dimension_numbers = #tpu.dot_dimension_numbers<[1], [0], [0], [1], [0, 0, 1, 1], [], []>} : vector<8x4xbf16>, vector<4x256xbf16>, vector<8x256xf32> -> vector<8x256xf32>
    %52 = arith.addf %43, %51 : vector<8x256xf32>
    %53 = vector.extract_strided_slice %4 {offsets = [0, 32], sizes = [4, 256], strides = [1, 1]} : vector<4x290xbf16> to vector<4x256xbf16>
    %c6 = arith.constant 6 : index
    %c0_36 = arith.constant 0 : index
    %c0_37 = arith.constant 0 : index
    %54 = vector.load %arg3[%c6, %c0_36, %c0_37] : memref<9x1x256xbf16, #tpu.memory_space<vmem>>, vector<1x1x256xbf16>
    %55 = vector.shape_cast %54 : vector<1x1x256xbf16> to vector<1x256xbf16>
    %56 = vector.broadcast %55 : vector<1x256xbf16> to vector<4x256xbf16>
    %57 = arith.mulf %53, %56 : vector<4x256xbf16>
    %c6_38 = arith.constant 6 : index
    %c0_39 = arith.constant 0 : index
    %c0_40 = arith.constant 0 : index
    %58 = vector.load %arg2[%c6_38, %c0_39, %c0_40] : memref<9x8x4xbf16, #tpu.memory_space<vmem>>, vector<1x8x4xbf16>
    %59 = vector.shape_cast %58 : vector<1x8x4xbf16> to vector<8x4xbf16>
    %cst_41 = arith.constant dense<0.000000e+00> : vector<8x256xf32>
    %60 = tpu.matmul %59, %57, %cst_41 {dimension_numbers = #tpu.dot_dimension_numbers<[1], [0], [0], [1], [0, 0, 1, 1], [], []>} : vector<8x4xbf16>, vector<4x256xbf16>, vector<8x256xf32> -> vector<8x256xf32>
    %61 = arith.addf %52, %60 : vector<8x256xf32>
    %62 = vector.extract_strided_slice %4 {offsets = [0, 33], sizes = [4, 256], strides = [1, 1]} : vector<4x290xbf16> to vector<4x256xbf16>
    %c7 = arith.constant 7 : index
    %c0_42 = arith.constant 0 : index
    %c0_43 = arith.constant 0 : index
    %63 = vector.load %arg3[%c7, %c0_42, %c0_43] : memref<9x1x256xbf16, #tpu.memory_space<vmem>>, vector<1x1x256xbf16>
    %64 = vector.shape_cast %63 : vector<1x1x256xbf16> to vector<1x256xbf16>
    %65 = vector.broadcast %64 : vector<1x256xbf16> to vector<4x256xbf16>
    %66 = arith.mulf %62, %65 : vector<4x256xbf16>
    %c7_44 = arith.constant 7 : index
    %c0_45 = arith.constant 0 : index
    %c0_46 = arith.constant 0 : index
    %67 = vector.load %arg2[%c7_44, %c0_45, %c0_46] : memref<9x8x4xbf16, #tpu.memory_space<vmem>>, vector<1x8x4xbf16>
    %68 = vector.shape_cast %67 : vector<1x8x4xbf16> to vector<8x4xbf16>
    %cst_47 = arith.constant dense<0.000000e+00> : vector<8x256xf32>
    %69 = tpu.matmul %68, %66, %cst_47 {dimension_numbers = #tpu.dot_dimension_numbers<[1], [0], [0], [1], [0, 0, 1, 1], [], []>} : vector<8x4xbf16>, vector<4x256xbf16>, vector<8x256xf32> -> vector<8x256xf32>
    %70 = arith.addf %61, %69 : vector<8x256xf32>
    %71 = vector.extract_strided_slice %4 {offsets = [0, 34], sizes = [4, 256], strides = [1, 1]} : vector<4x290xbf16> to vector<4x256xbf16>
    %c8 = arith.constant 8 : index
    %c0_48 = arith.constant 0 : index
    %c0_49 = arith.constant 0 : index
    %72 = vector.load %arg3[%c8, %c0_48, %c0_49] : memref<9x1x256xbf16, #tpu.memory_space<vmem>>, vector<1x1x256xbf16>
    %73 = vector.shape_cast %72 : vector<1x1x256xbf16> to vector<1x256xbf16>
    %74 = vector.broadcast %73 : vector<1x256xbf16> to vector<4x256xbf16>
    %75 = arith.mulf %71, %74 : vector<4x256xbf16>
    %c8_50 = arith.constant 8 : index
    %c0_51 = arith.constant 0 : index
    %c0_52 = arith.constant 0 : index
    %76 = vector.load %arg2[%c8_50, %c0_51, %c0_52] : memref<9x8x4xbf16, #tpu.memory_space<vmem>>, vector<1x8x4xbf16>
    %77 = vector.shape_cast %76 : vector<1x8x4xbf16> to vector<8x4xbf16>
    %cst_53 = arith.constant dense<0.000000e+00> : vector<8x256xf32>
    %78 = tpu.matmul %77, %75, %cst_53 {dimension_numbers = #tpu.dot_dimension_numbers<[1], [0], [0], [1], [0, 0, 1, 1], [], []>} : vector<8x4xbf16>, vector<4x256xbf16>, vector<8x256xf32> -> vector<8x256xf32>
    %79 = arith.addf %70, %78 : vector<8x256xf32>
    %80 = arith.truncf %79 : vector<8x256xf32> to vector<8x256xbf16>
    %c0_54 = arith.constant 0 : index
    %c0_55 = arith.constant 0 : index
    %c0_56 = arith.constant 0 : index
    %81 = vector.load %arg4[%c0_54, %c0_55, %c0_56] : memref<1x8x256xbf16, #tpu.memory_space<vmem>>, vector<1x8x256xbf16>
    %82 = vector.shape_cast %81 : vector<1x8x256xbf16> to vector<8x256xbf16>
    %83 = vector.shape_cast %80 : vector<8x256xbf16> to vector<1x8x256xbf16>
    tpu.vector_store %arg4[%c0_54, %c0_55, %c0_56], %83 {strides = array<i32>} : memref<1x8x256xbf16, #tpu.memory_space<vmem>>, vector<1x8x256xbf16>,
    %cst_57 = arith.constant dense<0.000000e+00> : vector<8xf32>
    %84 = vector.multi_reduction <add>, %79, %cst_57 [1] : vector<8x256xf32> to vector<8xf32>
    %85 = vector.shape_cast %84 : vector<8xf32> to vector<8x1xf32>
    %cst_58 = arith.constant 3.906250e-03 : f32
    %86 = vector.broadcast %cst_58 : f32 to vector<8x1xf32>
    %87 = arith.mulf %85, %86 : vector<8x1xf32>
    %88 = vector.broadcast %87 : vector<8x1xf32> to vector<8x256xf32>
    %89 = arith.subf %79, %88 : vector<8x256xf32>
    %c0_59 = arith.constant 0 : index
    %c0_60 = arith.constant 0 : index
    %c0_61 = arith.constant 0 : index
    %90 = vector.load %arg5[%c0_59, %c0_60, %c0_61] : memref<1x8x1xf32, #tpu.memory_space<vmem>>, vector<1x8x1xf32>
    %91 = vector.shape_cast %90 : vector<1x8x1xf32> to vector<8x1xf32>
    %92 = vector.shape_cast %85 : vector<8x1xf32> to vector<1x8x1xf32>
    tpu.vector_store %arg5[%c0_59, %c0_60, %c0_61], %92 {strides = array<i32>} : memref<1x8x1xf32, #tpu.memory_space<vmem>>, vector<1x8x1xf32>,
    %93 = arith.mulf %89, %89 : vector<8x256xf32>
    %cst_62 = arith.constant dense<0.000000e+00> : vector<8xf32>
    %94 = vector.multi_reduction <add>, %93, %cst_62 [1] : vector<8x256xf32> to vector<8xf32>
    %95 = vector.shape_cast %94 : vector<8xf32> to vector<8x1xf32>
    %c0_63 = arith.constant 0 : index
    %c0_64 = arith.constant 0 : index
    %c0_65 = arith.constant 0 : index
    %96 = vector.load %arg6[%c0_63, %c0_64, %c0_65] : memref<1x8x1xf32, #tpu.memory_space<vmem>>, vector<1x8x1xf32>
    %97 = vector.shape_cast %96 : vector<1x8x1xf32> to vector<8x1xf32>
    %98 = vector.shape_cast %95 : vector<8x1xf32> to vector<1x8x1xf32>
    tpu.vector_store %arg6[%c0_63, %c0_64, %c0_65], %98 {strides = array<i32>} : memref<1x8x1xf32, #tpu.memory_space<vmem>>, vector<1x8x1xf32>,
    return
  }
  func.func @transform_0(%arg0: i32) -> (i32, i32, i32) {
    %c0_i32 = arith.constant 0 : i32
    %c0_i32_0 = arith.constant 0 : i32
    %c0_i32_1 = arith.constant 0 : i32
    return %arg0, %c0_i32, %c0_i32_0 : i32, i32, i32
  }
  func.func @transform_1(%arg0: i32) -> (i32, i32, i32) {
    %c0_i32 = arith.constant 0 : i32
    %c0_i32_0 = arith.constant 0 : i32
    %c0_i32_1 = arith.constant 0 : i32
    %c0_i32_2 = arith.constant 0 : i32
    return %c0_i32, %c0_i32_0, %c0_i32_1 : i32, i32, i32
  }
  func.func @transform_2(%arg0: i32) -> (i32, i32, i32) {
    %c0_i32 = arith.constant 0 : i32
    %c0_i32_0 = arith.constant 0 : i32
    %c0_i32_1 = arith.constant 0 : i32
    %c0_i32_2 = arith.constant 0 : i32
    return %c0_i32, %c0_i32_0, %c0_i32_1 : i32, i32, i32
  }
  func.func @transform_3(%arg0: i32) -> (i32, i32, i32) {
    %c0_i32 = arith.constant 0 : i32
    %c0_i32_0 = arith.constant 0 : i32
    %c0_i32_1 = arith.constant 0 : i32
    return %arg0, %c0_i32, %c0_i32_0 : i32, i32, i32
  }
  func.func @transform_4(%arg0: i32) -> (i32, i32, i32) {
    %c0_i32 = arith.constant 0 : i32
    %c0_i32_0 = arith.constant 0 : i32
    %c0_i32_1 = arith.constant 0 : i32
    return %arg0, %c0_i32, %c0_i32_0 : i32, i32, i32
  }
  func.func @transform_5(%arg0: i32) -> (i32, i32, i32) {
    %c0_i32 = arith.constant 0 : i32
    %c0_i32_0 = arith.constant 0 : i32
    %c0_i32_1 = arith.constant 0 : i32
    return %arg0, %c0_i32, %c0_i32_0 : i32, i32, i32
  }
}

module attributes {stable_mosaic.version = 11 : i64} {
  func.func @bn_relu_kernel(%arg0: i32, %arg1: memref<16x256xbf16, #tpu.memory_space<vmem>>, %arg2: memref<16x1xf32, #tpu.memory_space<vmem>>, %arg3: memref<16x1xf32, #tpu.memory_space<vmem>>, %arg4: memref<16x256xf32, #tpu.memory_space<vmem>>) attributes {dimension_semantics = [#tpu.dimension_semantics<parallel>], iteration_bounds = array<i64: 1>, scalar_prefetch = 0 : i64, scratch_operands = 0 : i64, tpu.core_type = #tpu.core_type<tc>, window_params = [{transform_indices = @transform_0, window_bounds = array<i64: 16, 256>}, {transform_indices = @transform_1, window_bounds = array<i64: 16, 1>}, {transform_indices = @transform_2, window_bounds = array<i64: 16, 1>}, {transform_indices = @transform_3, window_bounds = array<i64: 16, 256>}]} {
    %c0 = arith.constant 0 : index
    %c0_0 = arith.constant 0 : index
    %0 = vector.load %arg1[%c0, %c0_0] : memref<16x256xbf16, #tpu.memory_space<vmem>>, vector<16x256xbf16>
    %1 = arith.extf %0 : vector<16x256xbf16> to vector<16x256xf32>
    %c0_1 = arith.constant 0 : index
    %c0_2 = arith.constant 0 : index
    %2 = vector.load %arg2[%c0_1, %c0_2] : memref<16x1xf32, #tpu.memory_space<vmem>>, vector<16x1xf32>
    %3 = vector.broadcast %2 : vector<16x1xf32> to vector<16x256xf32>
    %4 = arith.mulf %1, %3 : vector<16x256xf32>
    %c0_3 = arith.constant 0 : index
    %c0_4 = arith.constant 0 : index
    %5 = vector.load %arg3[%c0_3, %c0_4] : memref<16x1xf32, #tpu.memory_space<vmem>>, vector<16x1xf32>
    %6 = vector.broadcast %5 : vector<16x1xf32> to vector<16x256xf32>
    %7 = arith.addf %4, %6 : vector<16x256xf32>
    %cst = arith.constant 0.000000e+00 : f32
    %8 = vector.broadcast %cst : f32 to vector<16x256xf32>
    %9 = arith.maximumf %7, %8 : vector<16x256xf32>
    %c0_5 = arith.constant 0 : index
    %c0_6 = arith.constant 0 : index
    %10 = vector.load %arg4[%c0_5, %c0_6] : memref<16x256xf32, #tpu.memory_space<vmem>>, vector<16x256xf32>
    tpu.vector_store %arg4[%c0_5, %c0_6], %9 {strides = array<i32>} : memref<16x256xf32, #tpu.memory_space<vmem>>, vector<16x256xf32>,
    return
  }
  func.func @transform_0(%arg0: i32) -> (i32, i32) {
    %c0_i32 = arith.constant 0 : i32
    %c0_i32_0 = arith.constant 0 : i32
    return %arg0, %c0_i32 : i32, i32
  }
  func.func @transform_1(%arg0: i32) -> (i32, i32) {
    %c0_i32 = arith.constant 0 : i32
    %c0_i32_0 = arith.constant 0 : i32
    return %arg0, %c0_i32 : i32, i32
  }
  func.func @transform_2(%arg0: i32) -> (i32, i32) {
    %c0_i32 = arith.constant 0 : i32
    %c0_i32_0 = arith.constant 0 : i32
    return %arg0, %c0_i32 : i32, i32
  }
  func.func @transform_3(%arg0: i32) -> (i32, i32) {
    %c0_i32 = arith.constant 0 : i32
    %c0_i32_0 = arith.constant 0 : i32
    return %arg0, %c0_i32 : i32, i32
  }
}

</mosaic_0001>

<llo_original>
// kernel: tile.18
$region0: #{tile.18}
  #allocation0 [shape = 's32[1]{0}', space=sflag, size = 0x4, scoped, tag = 'scoped memory for tile.18']
  %s0 = inlined_call_operand.vmem [shape: f32[8], index: 0, kind: input, shape index: {}]
  %s1 = inlined_call_operand.vmem [shape: f32[2,8], index: 1, kind: output, shape index: {}]
  // Predicated region
  $region2: #{tile.18} parent=0 // pred_check
    _
  $region3: #{tile.18} parent=0 // pred_check_branch
    %3 = sbr.rel (0) target = $region5
  $region4: #{tile.18} parent=0 // pred_region
    _
  $region5: #{tile.18} parent=0 // pred_fallthru
    _
  %v4 = vld [vmem:[%s0] ss:$0 sm:$0xff]
  %5 = vst [vmem:[%s1] sm:$0x3] %v4

// kernel: tile.0
$region0: #{tile.0}
  %s0 = inlined_call_operand.vmem [shape: f32[2,8], index: 0, kind: input, shape index: {}]
  %s1 = inlined_call_operand.vmem [shape: f32[16,1], index: 1, kind: output, shape index: {}]
  $region1: #{tile.0} parent=0
    #allocation0 [shape = 'u8[4096]{0}', space=vmem, size = 0x1000, scoped, tag = 'scoped mem for input reshape']
    %s3 = sshllo.u32 0, 2
    %v4 = vld [vmem:[%s0] sm:%s3]
    %5 = vst [vmem:[#allocation0] sm:%s3] %v4
    %v6 = vld [vmem:[#allocation0] sm:$0x3]
    %vm7 = vcmask 7168
    %8 = vst.msk [vmem:[%s1] ss:$8 sm:$0x3] %vm7, %v6
    %v9 = vld [vmem:[#allocation0] sm:$0x3]
    %10 = vrot.lane.b32.xlu0 %v9, 127
    %v11 = vpop.permute.xlu0 %10
    %vm12 = vcmask 7168
    %s13 = scalar_lea.vmem %s1, 1
    %14 = vst.msk [vmem:[%s13] ss:$8 sm:$0x3] %vm12, %v11
    %v15 = vld [vmem:[#allocation0] sm:$0x3]
    %16 = vrot.lane.b32.xlu0 %v15, 126
    %v17 = vpop.permute.xlu0 %16
    %vm18 = vcmask 7168
    %s19 = scalar_lea.vmem %s1, 2
    %20 = vst.msk [vmem:[%s19] ss:$8 sm:$0x3] %vm18, %v17
    %v21 = vld [vmem:[#allocation0] sm:$0x3]
    %22 = vrot.lane.b32.xlu0 %v21, 125
    %v23 = vpop.permute.xlu0 %22
    %vm24 = vcmask 7168
    %s25 = scalar_lea.vmem %s1, 3
    %26 = vst.msk [vmem:[%s25] ss:$8 sm:$0x3] %vm24, %v23
    %v27 = vld [vmem:[#allocation0] sm:$0x3]
    %28 = vrot.lane.b32.xlu0 %v27, 124
    %v29 = vpop.permute.xlu0 %28
    %vm30 = vcmask 7168
    %s31 = scalar_lea.vmem %s1, 4
    %32 = vst.msk [vmem:[%s31] ss:$8 sm:$0x3] %vm30, %v29
    %v33 = vld [vmem:[#allocation0] sm:$0x3]
    %34 = vrot.lane.b32.xlu0 %v33, 123
    %v35 = vpop.permute.xlu0 %34
    %vm36 = vcmask 7168
    %s37 = scalar_lea.vmem %s1, 5
    %38 = vst.msk [vmem:[%s37] ss:$8 sm:$0x3] %vm36, %v35
    %v39 = vld [vmem:[#allocation0] sm:$0x3]
    %40 = vrot.lane.b32.xlu0 %v39, 122
    %v41 = vpop.permute.xlu0 %40
    %vm42 = vcmask 7168
    %s43 = scalar_lea.vmem %s1, 6
    %44 = vst.msk [vmem:[%s43] ss:$8 sm:$0x3] %vm42, %v41
    %v45 = vld [vmem:[#allocation0] sm:$0x3]
    %46 = vrot.lane.b32.xlu0 %v45, 121
    %v47 = vpop.permute.xlu0 %46
    %vm48 = vcmask 7168
    %s49 = scalar_lea.vmem %s1, 7
    %50 = vst.msk [vmem:[%s49] ss:$8 sm:$0x3] %vm48, %v47

// kernel: conv_batchnorm_b.3
$region0: #{conv_batchnorm_b.3}
  #allocation0 [shape = 'u32[]', space=smem, size = 0x4, offset = 0x4, fixed_abs, tag = 'smem constant byte address 0x4 - core index']
  #allocation1 [shape = 'u32[144,128]{1,0:T(1,128)}', space=vmem, size = 0x12000, scoped, tag = 'internal scratch']
  %s0 = inlined_call_operand.vmem [shape: bf16[16,256], index: 0, kind: input, shape index: {}]
  %s1 = inlined_call_operand.vmem [shape: f32[16,1], index: 1, kind: input, shape index: {}]
  %s2 = inlined_call_operand.vmem [shape: f32[16,1], index: 2, kind: input, shape index: {}]
  %s3 = inlined_call_operand.vmem [shape: f32[16,256], index: 3, kind: output, shape index: {}]
  %s4 = sld [smem:[#allocation0]]
  $region22: #{conv_batchnorm_b.3} parent=0
    _
  %s6 = ssub.s32 1, %s4
  %s7 = scalar_select 0, %s6, %s4
  // Predicated region
  $region2: #{conv_batchnorm_b.3} parent=0 // pred_check
    _
  $region3: #{conv_batchnorm_b.3} parent=0 // pred_check_branch
    %9 = sbr.rel (0) target = $region5
  $region4: #{conv_batchnorm_b.3} parent=0 // pred_region
    _
  $region5: #{conv_batchnorm_b.3} parent=0 // pred_fallthru
    _
  // Predicated region
  $region6: #{conv_batchnorm_b.3} parent=0 // pred_check
    _
  $region7: #{conv_batchnorm_b.3} parent=0 // pred_check_branch
    %11 = sbr.rel (0) target = $region9
  $region8: #{conv_batchnorm_b.3} parent=0 // pred_region
    _
  $region9: #{conv_batchnorm_b.3} parent=0 // pred_fallthru
    _
  // Predicated region
  $region10: #{conv_batchnorm_b.3} parent=0 // pred_check
    _
  $region11: #{conv_batchnorm_b.3} parent=0 // pred_check_branch
    %13 = sbr.rel (0) target = $region13
  $region12: #{conv_batchnorm_b.3} parent=0 // pred_region
    _
  $region13: #{conv_batchnorm_b.3} parent=0 // pred_fallthru
    _
  %v14 = vld [vmem:[%s0] sm:$0xff]
  %v15 = vld [vmem:[%s0 + $0x8] sm:$0xff]
  %v16 = vunpack.c.l.bf16 %v14
  %v17 = vunpack.c.h.bf16 %v14
  %v18 = vunpack.c.l.bf16 %v15
  %v19 = vunpack.c.h.bf16 %v15
  %v20 = vld [vmem:[%s1] sm:$0xff]
  %v21 = vld [vmem:[%s1 + $0x8] sm:$0xff]
  %23 = vset.pattern.permute.xlu0 0
  %24 = vperm.xlu0 %23, %v20
  %v25 = vpop.permute.xlu0 %24
  %28 = vset.pattern.permute.xlu0 0
  %29 = vperm.xlu0 %28, %v21
  %v30 = vpop.permute.xlu0 %29
  %v32 = vmul.f32 %v16, %v25
  %v33 = vmul.f32 %v17, %v25
  %v34 = vmul.f32 %v18, %v30
  %v35 = vmul.f32 %v19, %v30
  %v36 = vld [vmem:[%s2] sm:$0xff]
  %v37 = vld [vmem:[%s2 + $0x8] sm:$0xff]
  %39 = vset.pattern.permute.xlu0 0
  %40 = vperm.xlu0 %39, %v36
  %v41 = vpop.permute.xlu0 %40
  %44 = vset.pattern.permute.xlu0 0
  %45 = vperm.xlu0 %44, %v37
  %v46 = vpop.permute.xlu0 %45
  %v48 = vadd.f32 %v32, %v41
  %v49 = vadd.f32 %v33, %v41
  %v50 = vadd.f32 %v34, %v46
  %v51 = vadd.f32 %v35, %v46
  %v52 = vmax.f32 %v48, 0.0
  %v53 = vmax.f32 %v49, 0.0
  %v54 = vmax.f32 %v50, 0.0
  %v55 = vmax.f32 %v51, 0.0
  %56 = vst [vmem:[%s3] sm:$0xff] %v52
  %57 = vst [vmem:[%s3 + $0x8] sm:$0xff] %v53
  %58 = vst [vmem:[%s3 + $0x10] sm:$0xff] %v54
  %59 = vst [vmem:[%s3 + $0x18] sm:$0xff] %v55
  // Predicated region
  $region14: #{conv_batchnorm_b.3} parent=0 // pred_check
    _
  $region15: #{conv_batchnorm_b.3} parent=0 // pred_check_branch
    %61 = sbr.rel (0) target = $region17
  $region16: #{conv_batchnorm_b.3} parent=0 // pred_region
    _
  $region17: #{conv_batchnorm_b.3} parent=0 // pred_fallthru
    _
  // Predicated region
  $region18: #{conv_batchnorm_b.3} parent=0 // pred_check
    _
  $region19: #{conv_batchnorm_b.3} parent=0 // pred_check_branch
    %63 = sbr.rel (0) target = $region21
  $region20: #{conv_batchnorm_b.3} parent=0 // pred_region
    _
  $region21: #{conv_batchnorm_b.3} parent=0 // pred_fallthru
    _

// kernel: conv_batchnorm_b.2
$region0: #{conv_batchnorm_b.2}
  #allocation0 [shape = 'u32[]', space=smem, size = 0x4, offset = 0x4, fixed_abs, tag = 'smem constant byte address 0x4 - core index']
  #allocation1 [shape = 'u32[144,128]{1,0:T(1,128)}', space=vmem, size = 0x12000, scoped, tag = 'internal scratch']
  %s0 = inlined_call_operand.vmem [shape: f32[2,4,256], index: 0, kind: input, shape index: {}]
  %s1 = inlined_call_operand.vmem [shape: bf16[9,8,4], index: 1, kind: input, shape index: {}]
  %s2 = inlined_call_operand.vmem [shape: bf16[9,1,256], index: 2, kind: input, shape index: {}]
  %s3 = inlined_call_operand.vmem [shape: bf16[2,8,256], index: 3, kind: output, shape index: {0}]
  %s4 = inlined_call_operand.vmem [shape: f32[2,8,1], index: 4, kind: output, shape index: {1}]
  %s5 = inlined_call_operand.vmem [shape: f32[2,8,1], index: 5, kind: output, shape index: {2}]
  %6 = xla_tuple %s3, %s4, %s5
  %s7 = sld [smem:[#allocation0]]
  $region61: #{conv_batchnorm_b.2} parent=0
    _
  %s9 = ssub.s32 1, %s7
  %s10 = scalar_select 0, %s9, %s7
  loop: start=0, step=1, limit=4
  $region2: #{conv_batchnorm_b.2} parent=0 // loop_pre_header
    _
  $region3: #{conv_batchnorm_b.2} parent=0 // loop_header
    %s12 = sphi 0, %s16
    %p13 = scmp.ge.s32.totalorder %s12, 4
    %s22 = sphi 0, %s24
    %s25 = sphi 0, %s22
    %s26 = sphi 0, %s25
    %s42 = sphi 0, %s26
    %s46 = sphi 0, %s46
    %s48 = sphi 0, %s46
    %s49 = sphi 0, %s48
    %s63 = sphi 0, %s49
    %s67 = sphi 0, %s67
    %s69 = sphi 0, %s67
    %s70 = sphi 0, %s69
    %s84 = sphi 0, %s70
    %s90 = sphi 0, %s92
    %s93 = sphi 0, %s90
    %s94 = sphi 0, %s93
    %s110 = sphi 0, %s94
    %s116 = sphi 0, %s118
    %s119 = sphi 0, %s116
    %s120 = sphi 0, %s119
    %s136 = sphi 0, %s120
    %s142 = sphi 0, %s144
    %s145 = sphi 0, %s142
    %s146 = sphi 0, %s145
    %s162 = sphi 0, %s146
  $region4: #{conv_batchnorm_b.2} parent=0 // loop_header_branch
    %15 = sbr.rel (%p13) target = $region8
  $region5: #{conv_batchnorm_b.2} parent=0 // loop_body
    %s17 = ssub.s32 %s12, 1
    %s18 = ssub.s32 %s12, 2
    %s19 = sadd.s32 %s12, 1
    %s20 = ssub.s32 %s12, %s19
    %p21 = scmp.eq.s32.totalorder %s20, 0
    %s23 = sadd.s32 %s22, 1
    %s24 = scalar_select %p21, %s22, %s23
    %p27 = pneg %p21
    %p28 = scmp.eq.s32.totalorder %s12, 1
    %p29 = por %p27, %p28
    %p30 = scmp.ne.s32.totalorder %s22, %s25
    %p31 = scmp.eq.s32.totalorder %s12, 0
    %p32 = por %p30, %p31
    %p33 = scmp.ne.s32.totalorder %s22, %s25
    %p34 = scmp.eq.s32.totalorder %s17, 1
    %p35 = por %p33, %p34
    %p36 = scmp.ne.s32.totalorder %s25, %s26
    %p37 = scmp.eq.s32.totalorder %s17, 0
    %p38 = por %p36, %p37
    %p39 = scmp.ne.s32.totalorder %s25, %s26
    %p40 = scmp.eq.s32.totalorder %s18, 1
    %p41 = por %p39, %p40
    %p43 = scmp.ne.s32.totalorder %s26, %s42
    %p44 = scmp.eq.s32.totalorder %s18, 0
    %p45 = por %p43, %p44
    %s47 = sadd.s32 %s46, 1
    %p50 = scmp.eq.s32.totalorder %s12, 1
    %p51 = scmp.ne.s32.totalorder %s46, %s48
    %p52 = scmp.eq.s32.totalorder %s12, 0
    %p53 = por %p51, %p52
    %p54 = scmp.ne.s32.totalorder %s46, %s48
    %p55 = scmp.eq.s32.totalorder %s17, 1
    %p56 = por %p54, %p55
    %p57 = scmp.ne.s32.totalorder %s48, %s49
    %p58 = scmp.eq.s32.totalorder %s17, 0
    %p59 = por %p57, %p58
    %p60 = scmp.ne.s32.totalorder %s48, %s49
    %p61 = scmp.eq.s32.totalorder %s18, 1
    %p62 = por %p60, %p61
    %p64 = scmp.ne.s32.totalorder %s49, %s63
    %p65 = scmp.eq.s32.totalorder %s18, 0
    %p66 = por %p64, %p65
    %s68 = sadd.s32 %s67, 1
    %p71 = scmp.eq.s32.totalorder %s12, 1
    %p72 = scmp.ne.s32.totalorder %s67, %s69
    %p73 = scmp.eq.s32.totalorder %s12, 0
    %p74 = por %p72, %p73
    %p75 = scmp.ne.s32.totalorder %s67, %s69
    %p76 = scmp.eq.s32.totalorder %s17, 1
    %p77 = por %p75, %p76
    %p78 = scmp.ne.s32.totalorder %s69, %s70
    %p79 = scmp.eq.s32.totalorder %s17, 0
    %p80 = por %p78, %p79
    %p81 = scmp.ne.s32.totalorder %s69, %s70
    %p82 = scmp.eq.s32.totalorder %s18, 1
    %p83 = por %p81, %p82
    %p85 = scmp.ne.s32.totalorder %s70, %s84
    %p86 = scmp.eq.s32.totalorder %s18, 0
    %p87 = por %p85, %p86
    %s88 = ssub.s32 %s12, %s19
    %p89 = scmp.eq.s32.totalorder %s88, 0
    %s91 = sadd.s32 %s90, 1
    %s92 = scalar_select %p89, %s90, %s91
    %p95 = pneg %p89
    %p96 = scmp.eq.s32.totalorder %s12, 1
    %p97 = por %p95, %p96
    %p98 = scmp.ne.s32.totalorder %s90, %s93
    %p99 = scmp.eq.s32.totalorder %s12, 0
    %p100 = por %p98, %p99
    %p101 = scmp.ne.s32.totalorder %s90, %s93
    %p102 = scmp.eq.s32.totalorder %s17, 1
    %p103 = por %p101, %p102
    %p104 = scmp.ne.s32.totalorder %s93, %s94
    %p105 = scmp.eq.s32.totalorder %s17, 0
    %p106 = por %p104, %p105
    %p107 = scmp.ne.s32.totalorder %s93, %s94
    %p108 = scmp.eq.s32.totalorder %s18, 1
    %p109 = por %p107, %p108
    %p111 = scmp.ne.s32.totalorder %s94, %s110
    %p112 = scmp.eq.s32.totalorder %s18, 0
    %p113 = por %p111, %p112
    %s114 = ssub.s32 %s12, %s19
    %p115 = scmp.eq.s32.totalorder %s114, 0
    %s117 = sadd.s32 %s116, 1
    %s118 = scalar_select %p115, %s116, %s117
    %p121 = pneg %p115
    %p122 = scmp.eq.s32.totalorder %s12, 1
    %p123 = por %p121, %p122
    %p124 = scmp.ne.s32.totalorder %s116, %s119
    %p125 = scmp.eq.s32.totalorder %s12, 0
    %p126 = por %p124, %p125
    %p127 = scmp.ne.s32.totalorder %s116, %s119
    %p128 = scmp.eq.s32.totalorder %s17, 1
    %p129 = por %p127, %p128
    %p130 = scmp.ne.s32.totalorder %s119, %s120
    %p131 = scmp.eq.s32.totalorder %s17, 0
    %p132 = por %p130, %p131
    %p133 = scmp.ne.s32.totalorder %s119, %s120
    %p134 = scmp.eq.s32.totalorder %s18, 1
    %p135 = por %p133, %p134
    %p137 = scmp.ne.s32.totalorder %s120, %s136
    %p138 = scmp.eq.s32.totalorder %s18, 0
    %p139 = por %p137, %p138
    %s140 = ssub.s32 %s12, %s19
    %p141 = scmp.eq.s32.totalorder %s140, 0
    %s143 = sadd.s32 %s142, 1
    %s144 = scalar_select %p141, %s142, %s143
    %p147 = pneg %p141
    %p148 = scmp.eq.s32.totalorder %s12, 1
    %p149 = por %p147, %p148
    %p150 = scmp.ne.s32.totalorder %s142, %s145
    %p151 = scmp.eq.s32.totalorder %s12, 0
    %p152 = por %p150, %p151
    %p153 = scmp.ne.s32.totalorder %s142, %s145
    %p154 = scmp.eq.s32.totalorder %s17, 1
    %p155 = por %p153, %p154
    %p156 = scmp.ne.s32.totalorder %s145, %s146
    %p157 = scmp.eq.s32.totalorder %s17, 0
    %p158 = por %p156, %p157
    %p159 = scmp.ne.s32.totalorder %s145, %s146
    %p160 = scmp.eq.s32.totalorder %s18, 1
    %p161 = por %p159, %p160
    %p163 = scmp.ne.s32.totalorder %s146, %s162
    %p164 = scmp.eq.s32.totalorder %s18, 0
    %p165 = por %p163, %p164
    %p166 = scmp.le.s32.totalorder 1, %s12
    %p167 = scmp.lt.s32.totalorder %s12, 3
    %p168 = pnand %p166, %p167
    %p169 = pneg %p168
    // Predicated region
    $region9: #{conv_batchnorm_b.2} parent=5 // pred_check
      _
    $region10: #{conv_batchnorm_b.2} parent=5 // pred_check_branch
      %171 = sbr.rel (%p168) target = $region12
    $region11: #{conv_batchnorm_b.2} parent=5 // pred_region
      %s172 = ssub.s32 %s12, 1
      // Predicated region
      $region13: #{conv_batchnorm_b.2} parent=11 // pred_check
        %p173 = pneg %p59
      $region14: #{conv_batchnorm_b.2} parent=11 // pred_check_branch
        %175 = sbr.rel (%p173) target = $region16
      $region15: #{conv_batchnorm_b.2} parent=11 // pred_region
        _
      $region16: #{conv_batchnorm_b.2} parent=11 // pred_fallthru
        _
      // Predicated region
      $region17: #{conv_batchnorm_b.2} parent=11 // pred_check
        %p176 = pneg %p80
      $region18: #{conv_batchnorm_b.2} parent=11 // pred_check_branch
        %178 = sbr.rel (%p176) target = $region20
      $region19: #{conv_batchnorm_b.2} parent=11 // pred_region
        _
      $region20: #{conv_batchnorm_b.2} parent=11 // pred_fallthru
        _
    $region12: #{conv_batchnorm_b.2} parent=5 // pred_fallthru
      _
    %p179 = scmp.lt.s32.totalorder %s12, 2
    // Predicated region
    $region21: #{conv_batchnorm_b.2} parent=5 // pred_check
      %p180 = pneg %p179
    $region22: #{conv_batchnorm_b.2} parent=5 // pred_check_branch
      %182 = sbr.rel (%p180) target = $region24
    $region23: #{conv_batchnorm_b.2} parent=5 // pred_region
      // Predicated region
      $region25: #{conv_batchnorm_b.2} parent=23 // pred_check
        %p183 = pneg %p32
      $region26: #{conv_batchnorm_b.2} parent=23 // pred_check_branch
        %185 = sbr.rel (%p183) target = $region28
      $region27: #{conv_batchnorm_b.2} parent=23 // pred_region
        %p186 = scmp.lt.s32.totalorder %s12, 1
        %s187 = scalar_select %p186, %s12, 1
        %s188 = smul.addr %s187, 2
        %s189 = smul.addr %s188, 4
        %s190 = scalar_lea.vmem %s0, %s189
      $region28: #{conv_batchnorm_b.2} parent=23 // pred_fallthru
        _
    $region24: #{conv_batchnorm_b.2} parent=5 // pred_fallthru
      _
    %p191 = scmp.le.s32.totalorder 1, %s12
    %p192 = scmp.lt.s32.totalorder %s12, 3
    %p193 = pnand %p191, %p192
    %p194 = pneg %p193
    // Predicated region
    $region29: #{conv_batchnorm_b.2} parent=5 // pred_check
      _
    $region30: #{conv_batchnorm_b.2} parent=5 // pred_check_branch
      %196 = sbr.rel (%p193) target = $region32
    $region31: #{conv_batchnorm_b.2} parent=5 // pred_region
      %s197 = ssub.s32 %s12, 1
      %p198 = scmp.lt.s32.totalorder %s17, 1
      %s199 = scalar_select %p198, %s17, 1
      %s200 = smul.addr %s199, 2
      %s201 = smul.addr %s200, 4
      %s202 = scalar_lea.vmem %s0, %s201
      %p203 = pneg %p38
      %p204 = pneg %p35
      %p205 = pneg %p59
      %p206 = pneg %p56
      %p207 = pneg %p80
      %p208 = pneg %p77
      %p209 = pneg %p106
      %p210 = pneg %p103
      %p211 = scmp.lt.s32.totalorder %s17, 1
      %s212 = scalar_select %p211, %s17, 1
      %s213 = smul.addr %s212, 2
      %s214 = smul.addr %s213, 4
      %s215 = scalar_lea.vmem %s3, %s214
      %p216 = pneg %p132
      %p217 = pneg %p129
      %p218 = scmp.lt.s32.totalorder %s17, 1
      %s219 = scalar_select %p218, %s17, 1
      %s220 = smul.addr %s219, 8
      %s221 = scalar_lea.vmem %s4, %s220
      %p222 = pneg %p158
      %p223 = pneg %p155
      %p224 = scmp.lt.s32.totalorder %s17, 1
      %s225 = scalar_select %p224, %s17, 1
      %s226 = smul.addr %s225, 8
      %s227 = scalar_lea.vmem %s5, %s226
      %p228 = scmp.lt.s32.totalorder %s17, 1
      %s229 = scalar_select %p228, %s17, 1
      %s230 = smul.addr %s229, 2
      %s231 = smul.addr %s230, 4
      %s232 = scalar_lea.vmem %s0, %s231
      %p233 = scmp.lt.s32.totalorder %s17, 1
      %s234 = scalar_select %p233, %s17, 1
      %s235 = smul.addr %s234, 2
      %s236 = smul.addr %s235, 4
      %s237 = scalar_lea.vmem %s3, %s236
      %p238 = scmp.lt.s32.totalorder %s17, 1
      %s239 = scalar_select %p238, %s17, 1
      %s240 = smul.addr %s239, 8
      %s241 = scalar_lea.vmem %s4, %s240
      %p242 = scmp.lt.s32.totalorder %s17, 1
      %s243 = scalar_select %p242, %s17, 1
      %s244 = smul.addr %s243, 8
      %s245 = scalar_lea.vmem %s5, %s244
      %v247 = vld [vmem:[%s232] sm:$0xff]
      %v249 = vcombine.high %v247, %v247
      %v251 = vpack.c.bf16 %v247, %v247
      %v252 = vpack.c.bf16 %v249, %v249
      %255 = vrot.lane.b32.xlu0 %v251, 17
      %v256 = vpop.permute.xlu0 %255
      %257 = vrot.lane.b32.xlu0 %v252, 17
      %v258 = vpop.permute.xlu0 %257
      %vm259 = vcmask 138240
      %v260 = vsel %vm259, %v256, %v258
      %vm262 = vcmask 138240
      %v265 = vsel %vm262, 0, %v256
      %v268 = vsel %vm262, %v258, 0
      %v270 = vld [vmem:[%s2] sm:$0x3]
      %v273 = vunpack.c.l.s4 1966171168
      %v274 = vunpack.c.0.s8 %v273
      %v275 = vlaneseq
      %v276 = vshrl.u32 %v275, 7
      %v277 = vsub.s32 %v274, %v276
      %v278 = vrot.slane %v270, %v277
      %v279 = vcombine.high %v278, %v278
      %v281 = vunpack.c.l.s4 1966171168
      %v282 = vunpack.c.0.s8 %v281
      %v283 = vlaneseq
      %v284 = vshrl.u32 %v283, 7
      %v285 = vsub.s32 %v282, %v284
      %v286 = vrot.slane %v278, %v285
      %v288 = vunpack.c.l.s4 1966171168
      %v289 = vunpack.c.0.s8 %v288
      %v290 = vlaneseq
      %v291 = vshrl.u32 %v290, 7
      %v292 = vsub.s32 %v289, %v291
      %v293 = vrot.slane %v279, %v292
      %v295 = vpack.i.b16 %v286, %v286
      %v297 = vlaneseq
      %v298 = vshrl.u32 %v297, 7
      %v299 = vsub.s32 0, %v298
      %v300 = vrot.slane %v295, %v299
      %v302 = vpack.i.b16 %v293, %v293
      %v304 = vlaneseq
      %v305 = vshrl.u32 %v304, 7
      %v306 = vsub.s32 0, %v305
      %v307 = vrot.slane %v302, %v306
      %v308 = vmul.bf16 %v265, %v300
      %v309 = vmul.bf16 %v260, %v307
      %v310 = vld [vmem:[%s1] sm:$0xf]
      %s311 = scalar_lea.vmem %s2, 2
      %v312 = vld [vmem:[%s311] sm:$0x3]
      %v315 = vunpack.c.l.s4 1966171168
      %v316 = vunpack.c.0.s8 %v315
      %v317 = vlaneseq
      %v318 = vshrl.u32 %v317, 7
      %v319 = vsub.s32 %v316, %v318
      %v320 = vrot.slane %v312, %v319
      %v321 = vcombine.high %v320, %v320
      %v323 = vunpack.c.l.s4 1966171168
      %v324 = vunpack.c.0.s8 %v323
      %v325 = vlaneseq
      %v326 = vshrl.u32 %v325, 7
      %v327 = vsub.s32 %v324, %v326
      %v328 = vrot.slane %v320, %v327
      %v330 = vunpack.c.l.s4 1966171168
      %v331 = vunpack.c.0.s8 %v330
      %v332 = vlaneseq
      %v333 = vshrl.u32 %v332, 7
      %v334 = vsub.s32 %v331, %v333
      %v335 = vrot.slane %v321, %v334
      %v337 = vpack.i.b16 %v328, %v328
      %v339 = vlaneseq
      %v340 = vshrl.u32 %v339, 7
      %v341 = vsub.s32 0, %v340
      %v342 = vrot.slane %v337, %v341
      %v344 = vpack.i.b16 %v335, %v335
      %v346 = vlaneseq
      %v347 = vshrl.u32 %v346, 7
      %v348 = vsub.s32 0, %v347
      %v349 = vrot.slane %v344, %v348
      %352 = vrot.lane.b32.xlu0 %v342, 1
      %v353 = vpop.permute.xlu0 %352
      %354 = vrot.lane.b32.xlu0 %v349, 1
      %v355 = vpop.permute.xlu0 %354
      %vm356 = vcmask 7168
      %v357 = vsel %vm356, %v353, %v355
      %v361 = vmul.bf16 %v265, %v353
      %v362 = vmul.bf16 %v260, %v357
      %v363 = vmul.bf16 %v268, %v355
      %s364 = scalar_lea.vmem %s1, 4
      %v365 = vld [vmem:[%s364] sm:$0xf]
      %369 = vrot.lane.b32.xlu0 %v361, 127
      %v370 = vpop.permute.xlu0 %369
      %371 = vrot.lane.b32.xlu0 %v362, 127
      %v372 = vpop.permute.xlu0 %371
      %373 = vrot.lane.b32.xlu0 %v363, 127
      %v374 = vpop.permute.xlu0 %373
      %vm375 = vcmask 1039360
      %v376 = vsel %vm375, %v370, %v372
      %v377 = vsel %vm375, %v372, %v374
      %vm378 = vcmask 31744
      %v380 = vsel %vm378, %v365, 0
      %vm382 = vcmask 1041408
      %v384 = vsel %vm382, %v376, 0
      %v387 = vsel %vm382, %v377, 0
      %389 = vmatprep.subr.bf16.mxu0 %v387
      %390 = vmatpush1.bf16.msra.mxu0 %v384
      %391 = vmatprep.subr.bf16.mxu0 0
      %392 = vmatpush1.bf16.msra.mxu0 0
      %393 = vmatprep.subr.bf16.mxu0 0
      %394 = vmatpush1.bf16.msra.mxu0 0
      %395 = vmatprep.subr.bf16.mxu0 0
      %396 = vmatpush1.bf16.msra.mxu0 0
      %397 = vmatprep.subr.bf16.mxu0 0
      %398 = vmatpush1.bf16.msra.mxu0 0
      %399 = vmatprep.subr.bf16.mxu0 0
      %400 = vmatpush1.bf16.msra.mxu0 0
      %401 = vmatprep.subr.bf16.mxu0 0
      %402 = vmatpush1.bf16.msra.mxu0 0
      %403 = vmatprep.subr.bf16.mxu0 0
      %404 = vmatpush1.bf16.msra.mxu0 0
      %405 = vmatprep.subr.bf16.mxu0 0
      %406 = vmatpush1.bf16.msra.mxu0 0
      %407 = vmatprep.subr.bf16.mxu0 0
      %408 = vmatpush1.bf16.msra.mxu0 0
      %409 = vmatprep.subr.bf16.mxu0 0
      %410 = vmatpush1.bf16.msra.mxu0 0
      %411 = vmatprep.subr.bf16.mxu0 0
      %412 = vmatpush1.bf16.msra.mxu0 0
      %413 = vmatprep.subr.bf16.mxu0 0
      %414 = vmatpush1.bf16.msra.mxu0 0
      %415 = vmatprep.subr.bf16.mxu0 0
      %416 = vmatpush1.bf16.msra.mxu0 0
      %417 = vmatprep.subr.bf16.mxu0 0
      %418 = vmatpush1.bf16.msra.mxu0 0
      %419 = vmatprep.subr.bf16.mxu0 0
      %420 = vmatpush1.bf16.msra.mxu0 0
      %421 = vmatprep.mubr.bf16.mxu0 0
      %422 = vmatmul.mubr.bf16.gmra.mrb[0].mxu0 %v380
      %v423 = vpop.f32.mrb[0].mxu0
      %v424 = vadd.f32 0.0, %v423
      %v425 = vpop.f32.mrb[0].mxu0
      %v426 = vadd.f32 0.0, %v425
      %v427 = vpop.f32.mrb[0].mxu0
      %v428 = vpop.f32.mrb[0].mxu0
      %429 = vdwg.mxu0
      %v431 = vsel %vm378, %v310, 0
      %v434 = vsel %vm382, %v308, 0
      %v437 = vsel %vm382, %v309, 0
      %439 = vmatprep.subr.bf16.mxu0 %v437
      %440 = vmatpush1.bf16.msra.mxu0 %v434
      %441 = vmatprep.subr.bf16.mxu0 0
      %442 = vmatpush1.bf16.msra.mxu0 0
      %443 = vmatprep.subr.bf16.mxu0 0
      %444 = vmatpush1.bf16.msra.mxu0 0
      %445 = vmatprep.subr.bf16.mxu0 0
      %446 = vmatpush1.bf16.msra.mxu0 0
      %447 = vmatprep.subr.bf16.mxu0 0
      %448 = vmatpush1.bf16.msra.mxu0 0
      %449 = vmatprep.subr.bf16.mxu0 0
      %450 = vmatpush1.bf16.msra.mxu0 0
      %451 = vmatprep.subr.bf16.mxu0 0
      %452 = vmatpush1.bf16.msra.mxu0 0
      %453 = vmatprep.subr.bf16.mxu0 0
      %454 = vmatpush1.bf16.msra.mxu0 0
      %455 = vmatprep.subr.bf16.mxu0 0
      %456 = vmatpush1.bf16.msra.mxu0 0
      %457 = vmatprep.subr.bf16.mxu0 0
      %458 = vmatpush1.bf16.msra.mxu0 0
      %459 = vmatprep.subr.bf16.mxu0 0
      %460 = vmatpush1.bf16.msra.mxu0 0
      %461 = vmatprep.subr.bf16.mxu0 0
      %462 = vmatpush1.bf16.msra.mxu0 0
      %463 = vmatprep.subr.bf16.mxu0 0
      %464 = vmatpush1.bf16.msra.mxu0 0
      %465 = vmatprep.subr.bf16.mxu0 0
      %466 = vmatpush1.bf16.msra.mxu0 0
      %467 = vmatprep.subr.bf16.mxu0 0
      %468 = vmatpush1.bf16.msra.mxu0 0
      %469 = vmatprep.subr.bf16.mxu0 0
      %470 = vmatpush1.bf16.msra.mxu0 0
      %471 = vmatprep.mubr.bf16.mxu0 0
      %472 = vmatmul.mubr.bf16.gmra.mrb[0].mxu0 %v431
      %v473 = vpop.f32.mrb[0].mxu0
      %v474 = vadd.f32 %v424, %v473
      %v475 = vpop.f32.mrb[0].mxu0
      %v476 = vadd.f32 %v426, %v475
      %v477 = vpop.f32.mrb[0].mxu0
      %v478 = vpop.f32.mrb[0].mxu0
      %479 = vdwg.mxu0
      %s480 = scalar_lea.vmem %s2, 4
      %v481 = vld [vmem:[%s480] sm:$0x3]
      %v484 = vunpack.c.l.s4 1966171168
      %v485 = vunpack.c.0.s8 %v484
      %v486 = vlaneseq
      %v487 = vshrl.u32 %v486, 7
      %v488 = vsub.s32 %v485, %v487
      %v489 = vrot.slane %v481, %v488
      %v490 = vcombine.high %v489, %v489
      %v492 = vunpack.c.l.s4 1966171168
      %v493 = vunpack.c.0.s8 %v492
      %v494 = vlaneseq
      %v495 = vshrl.u32 %v494, 7
      %v496 = vsub.s32 %v493, %v495
      %v497 = vrot.slane %v489, %v496
      %v499 = vunpack.c.l.s4 1966171168
      %v500 = vunpack.c.0.s8 %v499
      %v501 = vlaneseq
      %v502 = vshrl.u32 %v501, 7
      %v503 = vsub.s32 %v500, %v502
      %v504 = vrot.slane %v490, %v503
      %v506 = vpack.i.b16 %v497, %v497
      %v508 = vlaneseq
      %v509 = vshrl.u32 %v508, 7
      %v510 = vsub.s32 0, %v509
      %v511 = vrot.slane %v506, %v510
      %v513 = vpack.i.b16 %v504, %v504
      %v515 = vlaneseq
      %v516 = vshrl.u32 %v515, 7
      %v517 = vsub.s32 0, %v516
      %v518 = vrot.slane %v513, %v517
      %521 = vrot.lane.b32.xlu0 %v511, 2
      %v522 = vpop.permute.xlu0 %521
      %523 = vrot.lane.b32.xlu0 %v518, 2
      %v524 = vpop.permute.xlu0 %523
      %vm525 = vcmask 15360
      %v526 = vsel %vm525, %v522, %v524
      %v530 = vmul.bf16 %v265, %v522
      %v531 = vmul.bf16 %v260, %v526
      %v532 = vmul.bf16 %v268, %v524
      %s533 = scalar_lea.vmem %s1, 8
      %v534 = vld [vmem:[%s533] sm:$0xf]
      %538 = vrot.lane.b32.xlu0 %v530, 126
      %v539 = vpop.permute.xlu0 %538
      %540 = vrot.lane.b32.xlu0 %v531, 126
      %v541 = vpop.permute.xlu0 %540
      %542 = vrot.lane.b32.xlu0 %v532, 126
      %v543 = vpop.permute.xlu0 %542
      %vm544 = vcmask 1031168
      %v545 = vsel %vm544, %v539, %v541
      %v546 = vsel %vm544, %v541, %v543
      %v548 = vsel %vm378, %v534, 0
      %v551 = vsel %vm382, %v545, 0
      %v554 = vsel %vm382, %v546, 0
      %556 = vmatprep.subr.bf16.mxu0 %v554
      %557 = vmatpush1.bf16.msra.mxu0 %v551
      %558 = vmatprep.subr.bf16.mxu0 0
      %559 = vmatpush1.bf16.msra.mxu0 0
      %560 = vmatprep.subr.bf16.mxu0 0
      %561 = vmatpush1.bf16.msra.mxu0 0
      %562 = vmatprep.subr.bf16.mxu0 0
      %563 = vmatpush1.bf16.msra.mxu0 0
      %564 = vmatprep.subr.bf16.mxu0 0
      %565 = vmatpush1.bf16.msra.mxu0 0
      %566 = vmatprep.subr.bf16.mxu0 0
      %567 = vmatpush1.bf16.msra.mxu0 0
      %568 = vmatprep.subr.bf16.mxu0 0
      %569 = vmatpush1.bf16.msra.mxu0 0
      %570 = vmatprep.subr.bf16.mxu0 0
      %571 = vmatpush1.bf16.msra.mxu0 0
      %572 = vmatprep.subr.bf16.mxu0 0
      %573 = vmatpush1.bf16.msra.mxu0 0
      %574 = vmatprep.subr.bf16.mxu0 0
      %575 = vmatpush1.bf16.msra.mxu0 0
      %576 = vmatprep.subr.bf16.mxu0 0
      %577 = vmatpush1.bf16.msra.mxu0 0
      %578 = vmatprep.subr.bf16.mxu0 0
      %579 = vmatpush1.bf16.msra.mxu0 0
      %580 = vmatprep.subr.bf16.mxu0 0
      %581 = vmatpush1.bf16.msra.mxu0 0
      %582 = vmatprep.subr.bf16.mxu0 0
      %583 = vmatpush1.bf16.msra.mxu0 0
      %584 = vmatprep.subr.bf16.mxu0 0
      %585 = vmatpush1.bf16.msra.mxu0 0
      %586 = vmatprep.subr.bf16.mxu0 0
      %587 = vmatpush1.bf16.msra.mxu0 0
      %588 = vmatprep.mubr.bf16.mxu0 0
      %589 = vmatmul.mubr.bf16.gmra.mrb[0].mxu0 %v548
      %v590 = vpop.f32.mrb[0].mxu0
      %v591 = vadd.f32 0.0, %v590
      %v592 = vpop.f32.mrb[0].mxu0
      %v593 = vadd.f32 0.0, %v592
      %v594 = vpop.f32.mrb[0].mxu0
      %v595 = vpop.f32.mrb[0].mxu0
      %596 = vdwg.mxu0
      %v597 = vadd.f32 %v474, %v591
      %v598 = vadd.f32 %v476, %v593
      %s599 = scalar_lea.vmem %s2, 6
      %v600 = vld [vmem:[%s599] sm:$0x3]
      %v603 = vunpack.c.l.s4 1966171168
      %v604 = vunpack.c.0.s8 %v603
      %v605 = vlaneseq
      %v606 = vshrl.u32 %v605, 7
      %v607 = vsub.s32 %v604, %v606
      %v608 = vrot.slane %v600, %v607
      %v609 = vcombine.high %v608, %v608
      %v611 = vunpack.c.l.s4 1966171168
      %v612 = vunpack.c.0.s8 %v611
      %v613 = vlaneseq
      %v614 = vshrl.u32 %v613, 7
      %v615 = vsub.s32 %v612, %v614
      %v616 = vrot.slane %v608, %v615
      %v618 = vunpack.c.l.s4 1966171168
      %v619 = vunpack.c.0.s8 %v618
      %v620 = vlaneseq
      %v621 = vshrl.u32 %v620, 7
      %v622 = vsub.s32 %v619, %v621
      %v623 = vrot.slane %v609, %v622
      %v625 = vpack.i.b16 %v616, %v616
      %v627 = vlaneseq
      %v628 = vshrl.u32 %v627, 7
      %v629 = vsub.s32 0, %v628
      %v630 = vrot.slane %v625, %v629
      %v632 = vpack.i.b16 %v623, %v623
      %v634 = vlaneseq
      %v635 = vshrl.u32 %v634, 7
      %v636 = vsub.s32 0, %v635
      %v637 = vrot.slane %v632, %v636
      %640 = vrot.lane.b32.xlu0 %v630, 16
      %v641 = vpop.permute.xlu0 %640
      %642 = vrot.lane.b32.xlu0 %v637, 16
      %v643 = vpop.permute.xlu0 %642
      %vm644 = vcmask 130048
      %v645 = vsel %vm644, %v641, %v643
      %v649 = vmul.bf16 %v265, %v641
      %v650 = vmul.bf16 %v260, %v645
      %v651 = vmul.bf16 %v268, %v643
      %s652 = scalar_lea.vmem %s1, 12
      %v653 = vld [vmem:[%s652] sm:$0xf]
      %657 = vrot.lane.b32.xlu0 %v649, 112
      %v658 = vpop.permute.xlu0 %657
      %659 = vrot.lane.b32.xlu0 %v650, 112
      %v660 = vpop.permute.xlu0 %659
      %661 = vrot.lane.b32.xlu0 %v651, 112
      %v662 = vpop.permute.xlu0 %661
      %vm663 = vcmask 916480
      %v664 = vsel %vm663, %v658, %v660
      %v665 = vsel %vm663, %v660, %v662
      %v667 = vsel %vm378, %v653, 0
      %v670 = vsel %vm382, %v664, 0
      %v673 = vsel %vm382, %v665, 0
      %675 = vmatprep.subr.bf16.mxu0 %v673
      %676 = vmatpush1.bf16.msra.mxu0 %v670
      %677 = vmatprep.subr.bf16.mxu0 0
      %678 = vmatpush1.bf16.msra.mxu0 0
      %679 = vmatprep.subr.bf16.mxu0 0
      %680 = vmatpush1.bf16.msra.mxu0 0
      %681 = vmatprep.subr.bf16.mxu0 0
      %682 = vmatpush1.bf16.msra.mxu0 0
      %683 = vmatprep.subr.bf16.mxu0 0
      %684 = vmatpush1.bf16.msra.mxu0 0
      %685 = vmatprep.subr.bf16.mxu0 0
      %686 = vmatpush1.bf16.msra.mxu0 0
      %687 = vmatprep.subr.bf16.mxu0 0
      %688 = vmatpush1.bf16.msra.mxu0 0
      %689 = vmatprep.subr.bf16.mxu0 0
      %690 = vmatpush1.bf16.msra.mxu0 0
      %691 = vmatprep.subr.bf16.mxu0 0
      %692 = vmatpush1.bf16.msra.mxu0 0
      %693 = vmatprep.subr.bf16.mxu0 0
      %694 = vmatpush1.bf16.msra.mxu0 0
      %695 = vmatprep.subr.bf16.mxu0 0
      %696 = vmatpush1.bf16.msra.mxu0 0
      %697 = vmatprep.subr.bf16.mxu0 0
      %698 = vmatpush1.bf16.msra.mxu0 0
      %699 = vmatprep.subr.bf16.mxu0 0
      %700 = vmatpush1.bf16.msra.mxu0 0
      %701 = vmatprep.subr.bf16.mxu0 0
      %702 = vmatpush1.bf16.msra.mxu0 0
      %703 = vmatprep.subr.bf16.mxu0 0
      %704 = vmatpush1.bf16.msra.mxu0 0
      %705 = vmatprep.subr.bf16.mxu0 0
      %706 = vmatpush1.bf16.msra.mxu0 0
      %707 = vmatprep.mubr.bf16.mxu0 0
      %708 = vmatmul.mubr.bf16.gmra.mrb[0].mxu0 %v667
      %v709 = vpop.f32.mrb[0].mxu0
      %v710 = vadd.f32 0.0, %v709
      %v711 = vpop.f32.mrb[0].mxu0
      %v712 = vadd.f32 0.0, %v711
      %v713 = vpop.f32.mrb[0].mxu0
      %v714 = vpop.f32.mrb[0].mxu0
      %715 = vdwg.mxu0
      %v716 = vadd.f32 %v597, %v710
      %v717 = vadd.f32 %v598, %v712
      %s718 = scalar_lea.vmem %s1, 16
      %v719 = vld [vmem:[%s718] sm:$0xf]
      %v721 = vsel %vm378, %v719, 0
      %v724 = vsel %vm382, %v251, 0
      %v727 = vsel %vm382, %v252, 0
      %729 = vmatprep.subr.bf16.mxu0 %v727
      %730 = vmatpush1.bf16.msra.mxu0 %v724
      %731 = vmatprep.subr.bf16.mxu0 0
      %732 = vmatpush1.bf16.msra.mxu0 0
      %733 = vmatprep.subr.bf16.mxu0 0
      %734 = vmatpush1.bf16.msra.mxu0 0
      %735 = vmatprep.subr.bf16.mxu0 0
      %736 = vmatpush1.bf16.msra.mxu0 0
      %737 = vmatprep.subr.bf16.mxu0 0
      %738 = vmatpush1.bf16.msra.mxu0 0
      %739 = vmatprep.subr.bf16.mxu0 0
      %740 = vmatpush1.bf16.msra.mxu0 0
      %741 = vmatprep.subr.bf16.mxu0 0
      %742 = vmatpush1.bf16.msra.mxu0 0
      %743 = vmatprep.subr.bf16.mxu0 0
      %744 = vmatpush1.bf16.msra.mxu0 0
      %745 = vmatprep.subr.bf16.mxu0 0
      %746 = vmatpush1.bf16.msra.mxu0 0
      %747 = vmatprep.subr.bf16.mxu0 0
      %748 = vmatpush1.bf16.msra.mxu0 0
      %749 = vmatprep.subr.bf16.mxu0 0
      %750 = vmatpush1.bf16.msra.mxu0 0
      %751 = vmatprep.subr.bf16.mxu0 0
      %752 = vmatpush1.bf16.msra.mxu0 0
      %753 = vmatprep.subr.bf16.mxu0 0
      %754 = vmatpush1.bf16.msra.mxu0 0
      %755 = vmatprep.subr.bf16.mxu0 0
      %756 = vmatpush1.bf16.msra.mxu0 0
      %757 = vmatprep.subr.bf16.mxu0 0
      %758 = vmatpush1.bf16.msra.mxu0 0
      %759 = vmatprep.subr.bf16.mxu0 0
      %760 = vmatpush1.bf16.msra.mxu0 0
      %761 = vmatprep.mubr.bf16.mxu0 0
      %762 = vmatmul.mubr.bf16.gmra.mrb[0].mxu0 %v721
      %v763 = vpop.f32.mrb[0].mxu0
      %v764 = vadd.f32 0.0, %v763
      %v765 = vpop.f32.mrb[0].mxu0
      %v766 = vadd.f32 0.0, %v765
      %v767 = vpop.f32.mrb[0].mxu0
      %v768 = vpop.f32.mrb[0].mxu0
      %769 = vdwg.mxu0
      %v770 = vadd.f32 %v716, %v764
      %v771 = vadd.f32 %v717, %v766
      %s772 = scalar_lea.vmem %s2, 10
      %v773 = vld [vmem:[%s772] sm:$0x3]
      %v776 = vunpack.c.l.s4 1966171168
      %v777 = vunpack.c.0.s8 %v776
      %v778 = vlaneseq
      %v779 = vshrl.u32 %v778, 7
      %v780 = vsub.s32 %v777, %v779
      %v781 = vrot.slane %v773, %v780
      %v782 = vcombine.high %v781, %v781
      %v784 = vunpack.c.l.s4 1966171168
      %v785 = vunpack.c.0.s8 %v784
      %v786 = vlaneseq
      %v787 = vshrl.u32 %v786, 7
      %v788 = vsub.s32 %v785, %v787
      %v789 = vrot.slane %v781, %v788
      %v791 = vunpack.c.l.s4 1966171168
      %v792 = vunpack.c.0.s8 %v791
      %v793 = vlaneseq
      %v794 = vshrl.u32 %v793, 7
      %v795 = vsub.s32 %v792, %v794
      %v796 = vrot.slane %v782, %v795
      %v798 = vpack.i.b16 %v789, %v789
      %v800 = vlaneseq
      %v801 = vshrl.u32 %v800, 7
      %v802 = vsub.s32 0, %v801
      %v803 = vrot.slane %v798, %v802
      %v805 = vpack.i.b16 %v796, %v796
      %v807 = vlaneseq
      %v808 = vshrl.u32 %v807, 7
      %v809 = vsub.s32 0, %v808
      %v810 = vrot.slane %v805, %v809
      %813 = vrot.lane.b32.xlu0 %v803, 18
      %v814 = vpop.permute.xlu0 %813
      %815 = vrot.lane.b32.xlu0 %v810, 18
      %v816 = vpop.permute.xlu0 %815
      %vm817 = vcmask 146432
      %v818 = vsel %vm817, %v814, %v816
      %v822 = vmul.bf16 %v265, %v814
      %v823 = vmul.bf16 %v260, %v818
      %v824 = vmul.bf16 %v268, %v816
      %s825 = scalar_lea.vmem %s1, 20
      %v826 = vld [vmem:[%s825] sm:$0xf]
      %830 = vrot.lane.b32.xlu0 %v822, 110
      %v831 = vpop.permute.xlu0 %830
      %832 = vrot.lane.b32.xlu0 %v823, 110
      %v833 = vpop.permute.xlu0 %832
      %834 = vrot.lane.b32.xlu0 %v824, 110
      %v835 = vpop.permute.xlu0 %834
      %vm836 = vcmask 900096
      %v837 = vsel %vm836, %v831, %v833
      %v838 = vsel %vm836, %v833, %v835
      %v840 = vsel %vm378, %v826, 0
      %v843 = vsel %vm382, %v837, 0
      %v846 = vsel %vm382, %v838, 0
      %848 = vmatprep.subr.bf16.mxu0 %v846
      %849 = vmatpush1.bf16.msra.mxu0 %v843
      %850 = vmatprep.subr.bf16.mxu0 0
      %851 = vmatpush1.bf16.msra.mxu0 0
      %852 = vmatprep.subr.bf16.mxu0 0
      %853 = vmatpush1.bf16.msra.mxu0 0
      %854 = vmatprep.subr.bf16.mxu0 0
      %855 = vmatpush1.bf16.msra.mxu0 0
      %856 = vmatprep.subr.bf16.mxu0 0
      %857 = vmatpush1.bf16.msra.mxu0 0
      %858 = vmatprep.subr.bf16.mxu0 0
      %859 = vmatpush1.bf16.msra.mxu0 0
      %860 = vmatprep.subr.bf16.mxu0 0
      %861 = vmatpush1.bf16.msra.mxu0 0
      %862 = vmatprep.subr.bf16.mxu0 0
      %863 = vmatpush1.bf16.msra.mxu0 0
      %864 = vmatprep.subr.bf16.mxu0 0
      %865 = vmatpush1.bf16.msra.mxu0 0
      %866 = vmatprep.subr.bf16.mxu0 0
      %867 = vmatpush1.bf16.msra.mxu0 0
      %868 = vmatprep.subr.bf16.mxu0 0
      %869 = vmatpush1.bf16.msra.mxu0 0
      %870 = vmatprep.subr.bf16.mxu0 0
      %871 = vmatpush1.bf16.msra.mxu0 0
      %872 = vmatprep.subr.bf16.mxu0 0
      %873 = vmatpush1.bf16.msra.mxu0 0
      %874 = vmatprep.subr.bf16.mxu0 0
      %875 = vmatpush1.bf16.msra.mxu0 0
      %876 = vmatprep.subr.bf16.mxu0 0
      %877 = vmatpush1.bf16.msra.mxu0 0
      %878 = vmatprep.subr.bf16.mxu0 0
      %879 = vmatpush1.bf16.msra.mxu0 0
      %880 = vmatprep.mubr.bf16.mxu0 0
      %881 = vmatmul.mubr.bf16.gmra.mrb[0].mxu0 %v840
      %v882 = vpop.f32.mrb[0].mxu0
      %v883 = vadd.f32 0.0, %v882
      %v884 = vpop.f32.mrb[0].mxu0
      %v885 = vadd.f32 0.0, %v884
      %v886 = vpop.f32.mrb[0].mxu0
      %v887 = vpop.f32.mrb[0].mxu0
      %888 = vdwg.mxu0
      %v889 = vadd.f32 %v770, %v883
      %v890 = vadd.f32 %v771, %v885
      %s891 = scalar_lea.vmem %s2, 12
      %v892 = vld [vmem:[%s891] sm:$0x3]
      %v895 = vunpack.c.l.s4 1966171168
      %v896 = vunpack.c.0.s8 %v895
      %v897 = vlaneseq
      %v898 = vshrl.u32 %v897, 7
      %v899 = vsub.s32 %v896, %v898
      %v900 = vrot.slane %v892, %v899
      %v901 = vcombine.high %v900, %v900
      %v903 = vunpack.c.l.s4 1966171168
      %v904 = vunpack.c.0.s8 %v903
      %v905 = vlaneseq
      %v906 = vshrl.u32 %v905, 7
      %v907 = vsub.s32 %v904, %v906
      %v908 = vrot.slane %v900, %v907
      %v910 = vunpack.c.l.s4 1966171168
      %v911 = vunpack.c.0.s8 %v910
      %v912 = vlaneseq
      %v913 = vshrl.u32 %v912, 7
      %v914 = vsub.s32 %v911, %v913
      %v915 = vrot.slane %v901, %v914
      %v917 = vpack.i.b16 %v908, %v908
      %v919 = vlaneseq
      %v920 = vshrl.u32 %v919, 7
      %v921 = vsub.s32 0, %v920
      %v922 = vrot.slane %v917, %v921
      %v924 = vpack.i.b16 %v915, %v915
      %v926 = vlaneseq
      %v927 = vshrl.u32 %v926, 7
      %v928 = vsub.s32 0, %v927
      %v929 = vrot.slane %v924, %v928
      %932 = vrot.lane.b32.xlu0 %v922, 32
      %v933 = vpop.permute.xlu0 %932
      %934 = vrot.lane.b32.xlu0 %v929, 32
      %v935 = vpop.permute.xlu0 %934
      %vm936 = vcmask 261120
      %v937 = vsel %vm936, %v933, %v935
      %v941 = vmul.bf16 %v265, %v933
      %v942 = vmul.bf16 %v260, %v937
      %v943 = vmul.bf16 %v268, %v935
      %s944 = scalar_lea.vmem %s1, 24
      %v945 = vld [vmem:[%s944] sm:$0xf]
      %949 = vrot.lane.b32.xlu0 %v941, 96
      %v950 = vpop.permute.xlu0 %949
      %951 = vrot.lane.b32.xlu0 %v942, 96
      %v952 = vpop.permute.xlu0 %951
      %953 = vrot.lane.b32.xlu0 %v943, 96
      %v954 = vpop.permute.xlu0 %953
      %vm955 = vcmask 785408
      %v956 = vsel %vm955, %v950, %v952
      %v957 = vsel %vm955, %v952, %v954
      %v959 = vsel %vm378, %v945, 0
      %v962 = vsel %vm382, %v956, 0
      %v965 = vsel %vm382, %v957, 0
      %967 = vmatprep.subr.bf16.mxu0 %v965
      %968 = vmatpush1.bf16.msra.mxu0 %v962
      %969 = vmatprep.subr.bf16.mxu0 0
      %970 = vmatpush1.bf16.msra.mxu0 0
      %971 = vmatprep.subr.bf16.mxu0 0
      %972 = vmatpush1.bf16.msra.mxu0 0
      %973 = vmatprep.subr.bf16.mxu0 0
      %974 = vmatpush1.bf16.msra.mxu0 0
      %975 = vmatprep.subr.bf16.mxu0 0
      %976 = vmatpush1.bf16.msra.mxu0 0
      %977 = vmatprep.subr.bf16.mxu0 0
      %978 = vmatpush1.bf16.msra.mxu0 0
      %979 = vmatprep.subr.bf16.mxu0 0
      %980 = vmatpush1.bf16.msra.mxu0 0
      %981 = vmatprep.subr.bf16.mxu0 0
      %982 = vmatpush1.bf16.msra.mxu0 0
      %983 = vmatprep.subr.bf16.mxu0 0
      %984 = vmatpush1.bf16.msra.mxu0 0
      %985 = vmatprep.subr.bf16.mxu0 0
      %986 = vmatpush1.bf16.msra.mxu0 0
      %987 = vmatprep.subr.bf16.mxu0 0
      %988 = vmatpush1.bf16.msra.mxu0 0
      %989 = vmatprep.subr.bf16.mxu0 0
      %990 = vmatpush1.bf16.msra.mxu0 0
      %991 = vmatprep.subr.bf16.mxu0 0
      %992 = vmatpush1.bf16.msra.mxu0 0
      %993 = vmatprep.subr.bf16.mxu0 0
      %994 = vmatpush1.bf16.msra.mxu0 0
      %995 = vmatprep.subr.bf16.mxu0 0
      %996 = vmatpush1.bf16.msra.mxu0 0
      %997 = vmatprep.subr.bf16.mxu0 0
      %998 = vmatpush1.bf16.msra.mxu0 0
      %999 = vmatprep.mubr.bf16.mxu0 0
      %1000 = vmatmul.mubr.bf16.gmra.mrb[0].mxu0 %v959
      %v1001 = vpop.f32.mrb[0].mxu0
      %v1002 = vadd.f32 0.0, %v1001
      %v1003 = vpop.f32.mrb[0].mxu0
      %v1004 = vadd.f32 0.0, %v1003
      %v1005 = vpop.f32.mrb[0].mxu0
      %v1006 = vpop.f32.mrb[0].mxu0
      %1007 = vdwg.mxu0
      %v1008 = vadd.f32 %v889, %v1002
      %v1009 = vadd.f32 %v890, %v1004
      %s1010 = scalar_lea.vmem %s2, 14
      %v1011 = vld [vmem:[%s1010] sm:$0x3]
      %v1014 = vunpack.c.l.s4 1966171168
      %v1015 = vunpack.c.0.s8 %v1014
      %v1016 = vlaneseq
      %v1017 = vshrl.u32 %v1016, 7
      %v1018 = vsub.s32 %v1015, %v1017
      %v1019 = vrot.slane %v1011, %v1018
      %v1020 = vcombine.high %v1019, %v1019
      %v1022 = vunpack.c.l.s4 1966171168
      %v1023 = vunpack.c.0.s8 %v1022
      %v1024 = vlaneseq
      %v1025 = vshrl.u32 %v1024, 7
      %v1026 = vsub.s32 %v1023, %v1025
      %v1027 = vrot.slane %v1019, %v1026
      %v1029 = vunpack.c.l.s4 1966171168
      %v1030 = vunpack.c.0.s8 %v1029
      %v1031 = vlaneseq
      %v1032 = vshrl.u32 %v1031, 7
      %v1033 = vsub.s32 %v1030, %v1032
      %v1034 = vrot.slane %v1020, %v1033
      %v1036 = vpack.i.b16 %v1027, %v1027
      %v1038 = vlaneseq
      %v1039 = vshrl.u32 %v1038, 7
      %v1040 = vsub.s32 0, %v1039
      %v1041 = vrot.slane %v1036, %v1040
      %v1043 = vpack.i.b16 %v1034, %v1034
      %v1045 = vlaneseq
      %v1046 = vshrl.u32 %v1045, 7
      %v1047 = vsub.s32 0, %v1046
      %v1048 = vrot.slane %v1043, %v1047
      %1051 = vrot.lane.b32.xlu0 %v1041, 33
      %v1052 = vpop.permute.xlu0 %1051
      %1053 = vrot.lane.b32.xlu0 %v1048, 33
      %v1054 = vpop.permute.xlu0 %1053
      %vm1055 = vcmask 269312
      %v1056 = vsel %vm1055, %v1052, %v1054
      %v1060 = vmul.bf16 %v265, %v1052
      %v1061 = vmul.bf16 %v260, %v1056
      %v1062 = vmul.bf16 %v268, %v1054
      %s1063 = scalar_lea.vmem %s1, 28
      %v1064 = vld [vmem:[%s1063] sm:$0xf]
      %1068 = vrot.lane.b32.xlu0 %v1060, 95
      %v1069 = vpop.permute.xlu0 %1068
      %1070 = vrot.lane.b32.xlu0 %v1061, 95
      %v1071 = vpop.permute.xlu0 %1070
      %1072 = vrot.lane.b32.xlu0 %v1062, 95
      %v1073 = vpop.permute.xlu0 %1072
      %vm1074 = vcmask 777216
      %v1075 = vsel %vm1074, %v1069, %v1071
      %v1076 = vsel %vm1074, %v1071, %v1073
      %v1078 = vsel %vm378, %v1064, 0
      %v1081 = vsel %vm382, %v1075, 0
      %v1084 = vsel %vm382, %v1076, 0
      %1086 = vmatprep.subr.bf16.mxu0 %v1084
      %1087 = vmatpush1.bf16.msra.mxu0 %v1081
      %1088 = vmatprep.subr.bf16.mxu0 0
      %1089 = vmatpush1.bf16.msra.mxu0 0
      %1090 = vmatprep.subr.bf16.mxu0 0
      %1091 = vmatpush1.bf16.msra.mxu0 0
      %1092 = vmatprep.subr.bf16.mxu0 0
      %1093 = vmatpush1.bf16.msra.mxu0 0
      %1094 = vmatprep.subr.bf16.mxu0 0
      %1095 = vmatpush1.bf16.msra.mxu0 0
      %1096 = vmatprep.subr.bf16.mxu0 0
      %1097 = vmatpush1.bf16.msra.mxu0 0
      %1098 = vmatprep.subr.bf16.mxu0 0
      %1099 = vmatpush1.bf16.msra.mxu0 0
      %1100 = vmatprep.subr.bf16.mxu0 0
      %1101 = vmatpush1.bf16.msra.mxu0 0
      %1102 = vmatprep.subr.bf16.mxu0 0
      %1103 = vmatpush1.bf16.msra.mxu0 0
      %1104 = vmatprep.subr.bf16.mxu0 0
      %1105 = vmatpush1.bf16.msra.mxu0 0
      %1106 = vmatprep.subr.bf16.mxu0 0
      %1107 = vmatpush1.bf16.msra.mxu0 0
      %1108 = vmatprep.subr.bf16.mxu0 0
      %1109 = vmatpush1.bf16.msra.mxu0 0
      %1110 = vmatprep.subr.bf16.mxu0 0
      %1111 = vmatpush1.bf16.msra.mxu0 0
      %1112 = vmatprep.subr.bf16.mxu0 0
      %1113 = vmatpush1.bf16.msra.mxu0 0
      %1114 = vmatprep.subr.bf16.mxu0 0
      %1115 = vmatpush1.bf16.msra.mxu0 0
      %1116 = vmatprep.subr.bf16.mxu0 0
      %1117 = vmatpush1.bf16.msra.mxu0 0
      %1118 = vmatprep.mubr.bf16.mxu0 0
      %1119 = vmatmul.mubr.bf16.gmra.mrb[0].mxu0 %v1078
      %v1120 = vpop.f32.mrb[0].mxu0
      %v1121 = vadd.f32 0.0, %v1120
      %v1122 = vpop.f32.mrb[0].mxu0
      %v1123 = vadd.f32 0.0, %v1122
      %v1124 = vpop.f32.mrb[0].mxu0
      %v1125 = vpop.f32.mrb[0].mxu0
      %1126 = vdwg.mxu0
      %v1127 = vadd.f32 %v1008, %v1121
      %v1128 = vadd.f32 %v1009, %v1123
      %s1129 = scalar_lea.vmem %s2, 16
      %v1130 = vld [vmem:[%s1129] sm:$0x3]
      %v1133 = vunpack.c.l.s4 1966171168
      %v1134 = vunpack.c.0.s8 %v1133
      %v1135 = vlaneseq
      %v1136 = vshrl.u32 %v1135, 7
      %v1137 = vsub.s32 %v1134, %v1136
      %v1138 = vrot.slane %v1130, %v1137
      %v1139 = vcombine.high %v1138, %v1138
      %v1141 = vunpack.c.l.s4 1966171168
      %v1142 = vunpack.c.0.s8 %v1141
      %v1143 = vlaneseq
      %v1144 = vshrl.u32 %v1143, 7
      %v1145 = vsub.s32 %v1142, %v1144
      %v1146 = vrot.slane %v1138, %v1145
      %v1148 = vunpack.c.l.s4 1966171168
      %v1149 = vunpack.c.0.s8 %v1148
      %v1150 = vlaneseq
      %v1151 = vshrl.u32 %v1150, 7
      %v1152 = vsub.s32 %v1149, %v1151
      %v1153 = vrot.slane %v1139, %v1152
      %v1155 = vpack.i.b16 %v1146, %v1146
      %v1157 = vlaneseq
      %v1158 = vshrl.u32 %v1157, 7
      %v1159 = vsub.s32 0, %v1158
      %v1160 = vrot.slane %v1155, %v1159
      %v1162 = vpack.i.b16 %v1153, %v1153
      %v1164 = vlaneseq
      %v1165 = vshrl.u32 %v1164, 7
      %v1166 = vsub.s32 0, %v1165
      %v1167 = vrot.slane %v1162, %v1166
      %1170 = vrot.lane.b32.xlu0 %v1160, 34
      %v1171 = vpop.permute.xlu0 %1170
      %1172 = vrot.lane.b32.xlu0 %v1167, 34
      %v1173 = vpop.permute.xlu0 %1172
      %vm1174 = vcmask 277504
      %v1175 = vsel %vm1174, %v1171, %v1173
      %v1179 = vmul.bf16 %v265, %v1171
      %v1180 = vmul.bf16 %v260, %v1175
      %v1181 = vmul.bf16 %v268, %v1173
      %s1182 = scalar_lea.vmem %s1, 32
      %v1183 = vld [vmem:[%s1182] sm:$0xf]
      %1187 = vrot.lane.b32.xlu0 %v1179, 94
      %v1188 = vpop.permute.xlu0 %1187
      %1189 = vrot.lane.b32.xlu0 %v1180, 94
      %v1190 = vpop.permute.xlu0 %1189
      %1191 = vrot.lane.b32.xlu0 %v1181, 94
      %v1192 = vpop.permute.xlu0 %1191
      %vm1193 = vcmask 769024
      %v1194 = vsel %vm1193, %v1188, %v1190
      %v1195 = vsel %vm1193, %v1190, %v1192
      %v1197 = vsel %vm378, %v1183, 0
      %v1200 = vsel %vm382, %v1194, 0
      %v1203 = vsel %vm382, %v1195, 0
      %1205 = vmatprep.subr.bf16.mxu0 %v1203
      %1206 = vmatpush1.bf16.msra.mxu0 %v1200
      %1207 = vmatprep.subr.bf16.mxu0 0
      %1208 = vmatpush1.bf16.msra.mxu0 0
      %1209 = vmatprep.subr.bf16.mxu0 0
      %1210 = vmatpush1.bf16.msra.mxu0 0
      %1211 = vmatprep.subr.bf16.mxu0 0
      %1212 = vmatpush1.bf16.msra.mxu0 0
      %1213 = vmatprep.subr.bf16.mxu0 0
      %1214 = vmatpush1.bf16.msra.mxu0 0
      %1215 = vmatprep.subr.bf16.mxu0 0
      %1216 = vmatpush1.bf16.msra.mxu0 0
      %1217 = vmatprep.subr.bf16.mxu0 0
      %1218 = vmatpush1.bf16.msra.mxu0 0
      %1219 = vmatprep.subr.bf16.mxu0 0
      %1220 = vmatpush1.bf16.msra.mxu0 0
      %1221 = vmatprep.subr.bf16.mxu0 0
      %1222 = vmatpush1.bf16.msra.mxu0 0
      %1223 = vmatprep.subr.bf16.mxu0 0
      %1224 = vmatpush1.bf16.msra.mxu0 0
      %1225 = vmatprep.subr.bf16.mxu0 0
      %1226 = vmatpush1.bf16.msra.mxu0 0
      %1227 = vmatprep.subr.bf16.mxu0 0
      %1228 = vmatpush1.bf16.msra.mxu0 0
      %1229 = vmatprep.subr.bf16.mxu0 0
      %1230 = vmatpush1.bf16.msra.mxu0 0
      %1231 = vmatprep.subr.bf16.mxu0 0
      %1232 = vmatpush1.bf16.msra.mxu0 0
      %1233 = vmatprep.subr.bf16.mxu0 0
      %1234 = vmatpush1.bf16.msra.mxu0 0
      %1235 = vmatprep.subr.bf16.mxu0 0
      %1236 = vmatpush1.bf16.msra.mxu0 0
      %1237 = vmatprep.mubr.bf16.mxu0 0
      %1238 = vmatmul.mubr.bf16.gmra.mrb[0].mxu0 %v1197
      %v1239 = vpop.f32.mrb[0].mxu0
      %v1240 = vadd.f32 0.0, %v1239
      %v1241 = vpop.f32.mrb[0].mxu0
      %v1242 = vadd.f32 0.0, %v1241
      %v1243 = vpop.f32.mrb[0].mxu0
      %v1244 = vpop.f32.mrb[0].mxu0
      %1245 = vdwg.mxu0
      %v1246 = vadd.f32 %v1127, %v1240
      %v1247 = vadd.f32 %v1128, %v1242
      %v1248 = vpack.c.bf16 %v1246, %v1246
      %v1249 = vpack.c.bf16 %v1247, %v1247
      %v1252 = vunpack.c.l.b16 %v1248
      %v1253 = vunpack.c.l.b16 %v1249
      %v1254 = vpack.c.b16 %v1253, %v1252
      %1256 = vst [vmem:[%s237] sm:$0xff] %v1254
      %v1257 = vadd.f32 %v1246, %v1247
      %1258 = vadd.xlane.f32.xlu0 %v1257
      %v1259 = vpop.xlane.xlu0 %1258
      %v1260 = vmul.f32 %v1259, 0.00390625
      %v1261 = vsub.f32 %v1246, %v1260
      %v1262 = vsub.f32 %v1247, %v1260
      %vm1263 = vcmask 7168
      %1264 = vst.msk [vmem:[%s241] sm:$0xff] %vm1263, %v1259
      %v1265 = vmul.f32 %v1261, %v1261
      %v1266 = vmul.f32 %v1262, %v1262
      %v1267 = vadd.f32 %v1265, %v1266
      %1268 = vadd.xlane.f32.xlu0 %v1267
      %v1269 = vpop.xlane.xlu0 %1268
      %1270 = vst.msk [vmem:[%s245] sm:$0xff] %vm1263, %v1269
      %p1271 = scmp.lt.s32.totalorder %s17, 1
      %s1272 = scalar_select %p1271, %s17, 1
      %s1273 = smul.addr %s1272, 2
      %s1274 = smul.addr %s1273, 4
      %s1275 = scalar_lea.vmem %s3, %s1274
      %p1276 = scmp.lt.s32.totalorder %s17, 1
      %s1277 = scalar_select %p1276, %s17, 1
      %s1278 = smul.addr %s1277, 8
      %s1279 = scalar_lea.vmem %s4, %s1278
      %p1280 = scmp.lt.s32.totalorder %s17, 1
      %s1281 = scalar_select %p1280, %s17, 1
      %s1282 = smul.addr %s1281, 8
      %s1283 = scalar_lea.vmem %s5, %s1282
      // Predicated region
      $region33: #{conv_batchnorm_b.2} parent=31 // pred_check
        %p1284 = pneg %p103
      $region34: #{conv_batchnorm_b.2} parent=31 // pred_check_branch
        %1286 = sbr.rel (%p1284) target = $region36
      $region35: #{conv_batchnorm_b.2} parent=31 // pred_region
        _
      $region36: #{conv_batchnorm_b.2} parent=31 // pred_fallthru
        _
      // Predicated region
      $region37: #{conv_batchnorm_b.2} parent=31 // pred_check
        %p1287 = pneg %p129
      $region38: #{conv_batchnorm_b.2} parent=31 // pred_check_branch
        %1289 = sbr.rel (%p1287) target = $region40
      $region39: #{conv_batchnorm_b.2} parent=31 // pred_region
        _
      $region40: #{conv_batchnorm_b.2} parent=31 // pred_fallthru
        _
      // Predicated region
      $region41: #{conv_batchnorm_b.2} parent=31 // pred_check
        %p1290 = pneg %p155
      $region42: #{conv_batchnorm_b.2} parent=31 // pred_check_branch
        %1292 = sbr.rel (%p1290) target = $region44
      $region43: #{conv_batchnorm_b.2} parent=31 // pred_region
        _
      $region44: #{conv_batchnorm_b.2} parent=31 // pred_fallthru
        _
    $region32: #{conv_batchnorm_b.2} parent=5 // pred_fallthru
      _
    %p1293 = scmp.le.s32.totalorder 2, %s12
    // Predicated region
    $region45: #{conv_batchnorm_b.2} parent=5 // pred_check
      %p1294 = pneg %p1293
    $region46: #{conv_batchnorm_b.2} parent=5 // pred_check_branch
      %1296 = sbr.rel (%p1294) target = $region48
    $region47: #{conv_batchnorm_b.2} parent=5 // pred_region
      %s1297 = ssub.s32 %s12, 2
      // Predicated region
      $region49: #{conv_batchnorm_b.2} parent=47 // pred_check
        %p1298 = pneg %p109
      $region50: #{conv_batchnorm_b.2} parent=47 // pred_check_branch
        %1300 = sbr.rel (%p1298) target = $region52
      $region51: #{conv_batchnorm_b.2} parent=47 // pred_region
        %p1301 = scmp.lt.s32.totalorder %s18, 1
        %s1302 = scalar_select %p1301, %s18, 1
        %s1303 = smul.addr %s1302, 2
        %s1304 = smul.addr %s1303, 4
        %s1305 = scalar_lea.vmem %s3, %s1304
      $region52: #{conv_batchnorm_b.2} parent=47 // pred_fallthru
        _
      // Predicated region
      $region53: #{conv_batchnorm_b.2} parent=47 // pred_check
        %p1306 = pneg %p135
      $region54: #{conv_batchnorm_b.2} parent=47 // pred_check_branch
        %1308 = sbr.rel (%p1306) target = $region56
      $region55: #{conv_batchnorm_b.2} parent=47 // pred_region
        %p1309 = scmp.lt.s32.totalorder %s18, 1
        %s1310 = scalar_select %p1309, %s18, 1
        %s1311 = smul.addr %s1310, 8
        %s1312 = scalar_lea.vmem %s4, %s1311
      $region56: #{conv_batchnorm_b.2} parent=47 // pred_fallthru
        _
      // Predicated region
      $region57: #{conv_batchnorm_b.2} parent=47 // pred_check
        %p1313 = pneg %p161
      $region58: #{conv_batchnorm_b.2} parent=47 // pred_check_branch
        %1315 = sbr.rel (%p1313) target = $region60
      $region59: #{conv_batchnorm_b.2} parent=47 // pred_region
        %p1316 = scmp.lt.s32.totalorder %s18, 1
        %s1317 = scalar_select %p1316, %s18, 1
        %s1318 = smul.addr %s1317, 8
        %s1319 = scalar_lea.vmem %s5, %s1318
      $region60: #{conv_batchnorm_b.2} parent=47 // pred_fallthru
        _
    $region48: #{conv_batchnorm_b.2} parent=5 // pred_fallthru
      _
  $region6: #{conv_batchnorm_b.2} parent=0 // loop_footer
    %s16 = sadd.s32 1, %s12
  $region7: #{conv_batchnorm_b.2} parent=0 // loop_footer_branch
    %11 = sbr.rel target = $region3
  $region8: #{conv_batchnorm_b.2} parent=0 // loop_exit
    _

</llo_original>
